<compile_context>
chip_gen: v7x
topology: tpu7x:2x2x1
jax: 0.10.0
libtpu: 0.0.40
codegen_flags: <defaults>
</compile_context>

<pallas_src>
import jax
import jax.numpy as jnp
from jax.experimental import pallas as pl
from jax.experimental.pallas import tpu as pltpu


# ----------------------------------------------------------------------------
# Chip gating: bf16 transcendentals only where the EUP supports them
# ----------------------------------------------------------------------------
def _use_bf16_transcendentals():
    """bf16 EUP exists on v6e / v7x; v5e and older must stay in f32."""
    try:
        kind = jax.devices()[0].device_kind.lower()
    except Exception:
        return False
    return any(tag in kind for tag in ("v6", "v7", "tpu7", "tpu6"))


# ----------------------------------------------------------------------------
# Fused Pallas kernel: conv-stem tile matmul + SiLU + pool-accumulate + MLP head
# ----------------------------------------------------------------------------
def make_stem_pool_mlp_kernel(inv_hw, tile_hw, cp, use_bf16_eup):
    """inv_hw = 1/(Ho*Wo), tile_hw = spatial rows per step, cp = padded C_out."""
    vec_acc = (tile_hw % 8 == 0)          # 8-sublane accumulator path
    groups = tile_hw // 8 if vec_acc else 0

    def kernel(p_ref, w_ref, b_ref, w1_ref, b1_ref, w2_ref, b2_ref,
               o_ref, acc_ref):
        t = pl.program_id(1)

        # ---- init pooled-sum accumulator once per batch element ----
        @pl.when(t == 0)
        def _init():
            acc_ref[...] = jnp.zeros_like(acc_ref)

        # ---- conv stem tile as im2col matmul on the MXU (bf16 -> f32 acc) ----
        conv = jnp.dot(p_ref[0], w_ref[...],
                       preferred_element_type=jnp.float32)    # [tile_hw, CP]
        conv = conv + b_ref[...]                               # bias broadcast

        # ---- SiLU = x * sigmoid(x); exp + approx reciprocal on the EUP ----
        if use_bf16_eup:
            # v6e / v7x: bf16 EUP doubles transcendental throughput.
            e = jnp.exp(-conv.astype(jnp.bfloat16)).astype(jnp.float32)
        else:
            # v5e: no bf16 EUP -> keep the transcendental in f32.
            e = jnp.exp(-conv)
        act = conv * pl.reciprocal(1.0 + e, approx=True)       # f32

        # ---- fused global average pool: accumulate channel sums in VMEM ----
        if vec_acc:
            # whole-vreg VALU adds per step; XLU reduce deferred to finalize
            acc_ref[...] += jnp.sum(act.reshape(groups, 8, cp), axis=0)
        else:
            acc_ref[...] += jnp.sum(act, axis=0, keepdims=True)

        # ---- classifier head on the last spatial tile ----
        @pl.when(t == pl.num_programs(1) - 1)
        def _finalize():
            pooled = jnp.sum(acc_ref[...], axis=0, keepdims=True) * inv_hw  # [1, CP]
            h = jnp.dot(pooled.astype(jnp.bfloat16), w1_ref[...],
                        preferred_element_type=jnp.float32)
            h = jnp.maximum(h + b1_ref[...], 0.0)              # ReLU (f32)
            out = jnp.dot(h.astype(jnp.bfloat16), w2_ref[...],
                          preferred_element_type=jnp.float32)
            o_ref[0] = (out + b2_ref[...]).astype(o_ref.dtype)  # [1, NCP]

    return kernel


# ----------------------------------------------------------------------------
# JAX glue
# ----------------------------------------------------------------------------
def _round_up(n, m):
    return ((n + m - 1) // m) * m


def _pad_to(x, axis, size):
    pad = size - x.shape[axis]
    if pad <= 0:
        return x
    widths = [(0, 0)] * x.ndim
    widths[axis] = (0, pad)
    return jnp.pad(x, widths)


def _pick_tile(hw, target, kp, cp, vmem_cap_bytes=16 << 20):
    """Largest divisor of hw that is a multiple of 8, <= target and VMEM-safe."""
    # per-row cost: 2x bf16 patch buffers + ~6x f32 conv/act intermediates
    per_row = 2 * kp * 2 + 6 * cp * 4
    max_rows = max(8, vmem_cap_bytes // per_row)
    t = min(target, hw, max_rows)
    for cand in range(t, 0, -1):
        if hw % cand == 0 and (cand % 8 == 0 or cand == hw):
            return cand
    # Fallback: block == full dim (legal, but can be large for awkward odd HW;
    # the (1,CP) accumulator path is used automatically if hw % 8 != 0).
    return hw


def extract_patches(x_nhwc, ksize=3, stride=2, pad=1):
    """im2col for the 3x3 s2 stem.  K axis ordered (ki, kj, C).  Keeps dtype."""
    B, H, W, C = x_nhwc.shape
    xp = jnp.pad(x_nhwc, ((0, 0), (pad, pad), (pad, pad), (0, 0)))
    Ho = (H + 2 * pad - ksize) // stride + 1
    Wo = (W + 2 * pad - ksize) // stride + 1
    cols = []
    for ki in range(ksize):
        for kj in range(ksize):
            cols.append(
                xp[:, ki:ki + Ho * stride:stride, kj:kj + Wo * stride:stride, :]
            )
    patches = jnp.concatenate(cols, axis=-1)      # [B, Ho, Wo, k*k*C]
    return patches.reshape(B, Ho * Wo, ksize * ksize * C), Ho, Wo


# ----------------------------------------------------------------------------
# Model
# ----------------------------------------------------------------------------
def init_params(key, in_ch=3, num_features=32, hidden=256, num_classes=3):
    k1, k2, k3, k4, k5 = jax.random.split(key, 5)
    ksize = 3
    fan_stem = in_ch * ksize * ksize
    # NOTE: if loading real torch weights, permute conv weight
    # [C_out, C_in, kh, kw] -> (kh, kw, C_in, C_out).reshape(K, C_out) and
    # transpose torch Linear [out, in] -> [in, out].
    return {
        "stem_w": jax.random.normal(k1, (fan_stem, num_features), jnp.float32)
        * (2.0 / fan_stem) ** 0.5,
        "stem_b": jnp.zeros((num_features,), jnp.float32),
        "fc1_w": jax.random.uniform(
            k2, (num_features, hidden), jnp.float32,
            -1.0 / num_features ** 0.5, 1.0 / num_features ** 0.5),
        "fc1_b": jax.random.uniform(
            k3, (hidden,), jnp.float32,
            -1.0 / num_features ** 0.5, 1.0 / num_features ** 0.5),
        "fc2_w": jax.random.uniform(
            k4, (hidden, num_classes), jnp.float32,
            -1.0 / hidden ** 0.5, 1.0 / hidden ** 0.5),
        "fc2_b": jax.random.uniform(
            k5, (num_classes,), jnp.float32,
            -1.0 / hidden ** 0.5, 1.0 / hidden ** 0.5),
    }


def stroke_classifier_forward(x_nchw, params, *, tile_hw_target=4096):
    # layout: PyTorch NCHW -> NHWC (channels on the lane axis); bf16 before
    # im2col so no f32 patch intermediate is ever materialized in HBM.
    x = jnp.transpose(x_nchw, (0, 2, 3, 1)).astype(jnp.bfloat16)
    B = x.shape[0]

    patches, Ho, Wo = extract_patches(x, ksize=3, stride=2, pad=1)
    HW = Ho * Wo
    K = patches.shape[-1]
    F = params["stem_w"].shape[1]
    H1 = params["fc1_w"].shape[1]
    NC = params["fc2_w"].shape[1]

    # MXU / lane friendly padded dims (zero padding is exact: SiLU(0)=0)
    KP = _round_up(K, 8)
    CP = _round_up(F, 128)
    H1P = _round_up(H1, 128)
    NCP = _round_up(NC, 128)

    # bf16 activations / weights, f32 biases (f32 accumulation in-kernel)
    p = _pad_to(patches, 2, KP)                                     # bf16 [B, HW, KP]
    w = _pad_to(_pad_to(params["stem_w"], 0, KP), 1, CP).astype(jnp.bfloat16)
    b = _pad_to(params["stem_b"], 0, CP).reshape(1, CP).astype(jnp.float32)
    w1 = _pad_to(_pad_to(params["fc1_w"], 0, CP), 1, H1P).astype(jnp.bfloat16)
    b1 = _pad_to(params["fc1_b"], 0, H1P).reshape(1, H1P).astype(jnp.float32)
    w2 = _pad_to(_pad_to(params["fc2_w"], 0, H1P), 1, NCP).astype(jnp.bfloat16)
    b2 = _pad_to(params["fc2_b"], 0, NCP).reshape(1, NCP).astype(jnp.float32)

    tile_hw = _pick_tile(HW, tile_hw_target, KP, CP)
    T = HW // tile_hw
    acc_rows = 8 if tile_hw % 8 == 0 else 1

    use_bf16_eup = _use_bf16_transcendentals()
    kernel = make_stem_pool_mlp_kernel(1.0 / HW, tile_hw, CP, use_bf16_eup)

    flops = 2 * B * HW * KP * CP + B * (2 * CP * H1P + 2 * H1P * NCP)
    bytes_accessed = (p.size * 2 + (w.size + w1.size + w2.size) * 2
                      + (b.size + b1.size + b2.size) * 4 + B * NCP * 4)
    cost = pl.CostEstimate(flops=flops, transcendentals=2 * B * HW * CP,
                           bytes_accessed=bytes_accessed)

    # vmem limit from the actual footprint (clamped): matters on v7x (64 MiB).
    weight_bytes = ((w.size + w1.size + w2.size) * 2
                    + (b.size + b1.size + b2.size) * 4)
    per_step_bytes = (2 * tile_hw * KP * 2            # double-buffered patch tile
                      + 6 * tile_hw * CP * 4          # f32 conv/act intermediates
                      + 2 * weight_bytes              # resident (dbl-buffered) weights
                      + 8 * CP * 4 + 2 * NCP * 4)     # accumulator + output
    vmem_limit = int(min(max(per_step_bytes + (2 << 20), 8 << 20), 32 << 20))

    out = pl.pallas_call(
        kernel,
        out_shape=jax.ShapeDtypeStruct((B, 1, NCP), jnp.float32),
        grid_spec=pltpu.PrefetchScalarGridSpec(
            num_scalar_prefetch=0,
            # batch OUTER/"parallel", spatial tile INNER/"arbitrary":
            # required for the per-batch accumulator init/finalize pattern.
            grid=(B, T),
            in_specs=[
                pl.BlockSpec((1, tile_hw, KP), lambda bi, ti: (bi, ti, 0)),
                pl.BlockSpec((KP, CP), lambda bi, ti: (0, 0)),
                pl.BlockSpec((1, CP), lambda bi, ti: (0, 0)),
                pl.BlockSpec((CP, H1P), lambda bi, ti: (0, 0)),
                pl.BlockSpec((1, H1P), lambda bi, ti: (0, 0)),
                pl.BlockSpec((H1P, NCP), lambda bi, ti: (0, 0)),
                pl.BlockSpec((1, NCP), lambda bi, ti: (0, 0)),
            ],
            out_specs=pl.BlockSpec((1, 1, NCP), lambda bi, ti: (bi, 0, 0)),
            scratch_shapes=[pltpu.VMEM((acc_rows, CP), jnp.float32)],
        ),
        compiler_params=pltpu.CompilerParams(
            dimension_semantics=("parallel", "arbitrary"),
            vmem_limit_bytes=vmem_limit,
        ),
        cost_estimate=cost,
    )(p, w, b, w1, b1, w2, b2)

    # slice the lane padding back off (num_classes=3)
    return out.reshape(B, NCP)[:, :NC]


if __name__ == "__main__":
    key = jax.random.PRNGKey(0)
    pkey, xkey = jax.random.split(key)

    params = init_params(pkey, in_ch=3, num_features=32, hidden=256,
                         num_classes=3)

    # small image-classifier input, NCHW [B=2, C=3, 64, 64]
    # (64x64 -> Ho*Wo = 1024 -> single 1024-row spatial tile per batch element)
    x = jax.random.normal(xkey, (2, 3, 64, 64), jnp.float32)

    out = jax.jit(stroke_classifier_forward)(x, params)
    out = jax.block_until_ready(out)
    assert out.shape == (2, 3) and out.dtype == jnp.float32
    print("KERNEL_OK")
</pallas_src>

<mosaic_0001>
module attributes {stable_mosaic.version = 11 : i64} {
  func.func @kernel(%arg0: i32, %arg1: i32, %arg2: memref<1x1024x32xbf16, #tpu.memory_space<vmem>>, %arg3: memref<32x128xbf16, #tpu.memory_space<vmem>>, %arg4: memref<1x128xf32, #tpu.memory_space<vmem>>, %arg5: memref<128x256xbf16, #tpu.memory_space<vmem>>, %arg6: memref<1x256xf32, #tpu.memory_space<vmem>>, %arg7: memref<256x128xbf16, #tpu.memory_space<vmem>>, %arg8: memref<1x128xf32, #tpu.memory_space<vmem>>, %arg9: memref<1x1x128xf32, #tpu.memory_space<vmem>>, %arg10: memref<8x128xf32, #tpu.memory_space<vmem>>) attributes {dimension_semantics = [#tpu.dimension_semantics<parallel>, #tpu.dimension_semantics<arbitrary>], iteration_bounds = array<i64: 2, 1>, scalar_prefetch = 0 : i64, scratch_operands = 1 : i64, tpu.core_type = #tpu.core_type<tc>, window_params = [{transform_indices = @transform_0, window_bounds = array<i64: 1, 1024, 32>}, {pipeline_mode = #tpu.pipeline_mode<synchronous>, transform_indices = @transform_1, window_bounds = array<i64: 32, 128>}, {pipeline_mode = #tpu.pipeline_mode<synchronous>, transform_indices = @transform_2, window_bounds = array<i64: 1, 128>}, {pipeline_mode = #tpu.pipeline_mode<synchronous>, transform_indices = @transform_3, window_bounds = array<i64: 128, 256>}, {pipeline_mode = #tpu.pipeline_mode<synchronous>, transform_indices = @transform_4, window_bounds = array<i64: 1, 256>}, {pipeline_mode = #tpu.pipeline_mode<synchronous>, transform_indices = @transform_5, window_bounds = array<i64: 256, 128>}, {pipeline_mode = #tpu.pipeline_mode<synchronous>, transform_indices = @transform_6, window_bounds = array<i64: 1, 128>}, {transform_indices = @transform_7, window_bounds = array<i64: 1, 1, 128>}]} {
    %c0_i32 = arith.constant 0 : i32
    %0 = arith.cmpi eq, %arg1, %c0_i32 : i32
    %1 = arith.extui %0 : i1 to i32
    %c0_i32_0 = arith.constant 0 : i32
    %2 = arith.cmpi ne, %1, %c0_i32_0 : i32
    scf.if %2 {
      %cst_16 = arith.constant 0.000000e+00 : f32
      %25 = vector.broadcast %cst_16 : f32 to vector<8x128xf32>
      %c0_17 = arith.constant 0 : index
      %c0_18 = arith.constant 0 : index
      %26 = vector.load %arg10[%c0_17, %c0_18] : memref<8x128xf32, #tpu.memory_space<vmem>>, vector<8x128xf32>
      tpu.vector_store %arg10[%c0_17, %c0_18], %25 {strides = array<i32>} : memref<8x128xf32, #tpu.memory_space<vmem>>, vector<8x128xf32>,
    } else {
    }
    %c0 = arith.constant 0 : index
    %c0_1 = arith.constant 0 : index
    %c0_2 = arith.constant 0 : index
    %3 = vector.load %arg2[%c0, %c0_1, %c0_2] : memref<1x1024x32xbf16, #tpu.memory_space<vmem>>, vector<1x1024x32xbf16>
    %4 = vector.shape_cast %3 : vector<1x1024x32xbf16> to vector<1024x32xbf16>
    %c0_3 = arith.constant 0 : index
    %c0_4 = arith.constant 0 : index
    %5 = vector.load %arg3[%c0_3, %c0_4] : memref<32x128xbf16, #tpu.memory_space<vmem>>, vector<32x128xbf16>
    %cst = arith.constant dense<0.000000e+00> : vector<1024x128xf32>
    %6 = tpu.matmul %4, %5, %cst {dimension_numbers = #tpu.dot_dimension_numbers<[1], [0], [0], [1], [0, 0, 1, 1], [], []>} : vector<1024x32xbf16>, vector<32x128xbf16>, vector<1024x128xf32> -> vector<1024x128xf32>
    %c0_5 = arith.constant 0 : index
    %c0_6 = arith.constant 0 : index
    %7 = vector.load %arg4[%c0_5, %c0_6] : memref<1x128xf32, #tpu.memory_space<vmem>>, vector<1x128xf32>
    %8 = vector.broadcast %7 : vector<1x128xf32> to vector<1024x128xf32>
    %9 = arith.addf %6, %8 : vector<1024x128xf32>
    %cst_7 = arith.constant 0.000000e+00 : f32
    %10 = vector.broadcast %cst_7 : f32 to vector<1024x128xf32>
    %11 = arith.subf %10, %9 : vector<1024x128xf32>
    %12 = math.exp %11 : vector<1024x128xf32>
    %cst_8 = arith.constant 1.000000e+00 : f32
    %13 = vector.broadcast %cst_8 : f32 to vector<1024x128xf32>
    %14 = arith.addf %13, %12 : vector<1024x128xf32>
    %15 = tpu.reciprocal %14 {approx = true} : vector<1024x128xf32> -> vector<1024x128xf32>
    %16 = arith.mulf %9, %15 : vector<1024x128xf32>
    %c0_9 = arith.constant 0 : index
    %c0_10 = arith.constant 0 : index
    %17 = vector.load %arg10[%c0_9, %c0_10] : memref<8x128xf32, #tpu.memory_space<vmem>>, vector<8x128xf32>
    %18 = vector.shape_cast %16 : vector<1024x128xf32> to vector<128x8x128xf32>
    %cst_11 = arith.constant dense<0.000000e+00> : vector<8x128xf32>
    %19 = vector.multi_reduction <add>, %18, %cst_11 [0] : vector<128x8x128xf32> to vector<8x128xf32>
    %20 = arith.addf %17, %19 : vector<8x128xf32>
    %c0_12 = arith.constant 0 : index
    %c0_13 = arith.constant 0 : index
    %21 = vector.load %arg10[%c0_12, %c0_13] : memref<8x128xf32, #tpu.memory_space<vmem>>, vector<8x128xf32>
    tpu.vector_store %arg10[%c0_12, %c0_13], %20 {strides = array<i32>} : memref<8x128xf32, #tpu.memory_space<vmem>>, vector<8x128xf32>,
    %c0_i32_14 = arith.constant 0 : i32
    %22 = arith.cmpi eq, %arg1, %c0_i32_14 : i32
    %23 = arith.extui %22 : i1 to i32
    %c0_i32_15 = arith.constant 0 : i32
    %24 = arith.cmpi ne, %23, %c0_i32_15 : i32
    scf.if %24 {
      %c0_16 = arith.constant 0 : index
      %c0_17 = arith.constant 0 : index
      %25 = vector.load %arg10[%c0_16, %c0_17] : memref<8x128xf32, #tpu.memory_space<vmem>>, vector<8x128xf32>
      %cst_18 = arith.constant dense<0.000000e+00> : vector<128xf32>
      %26 = vector.multi_reduction <add>, %25, %cst_18 [0] : vector<8x128xf32> to vector<128xf32>
      %27 = vector.shape_cast %26 : vector<128xf32> to vector<1x128xf32>
      %cst_19 = arith.constant 9.765625E-4 : f32
      %28 = vector.broadcast %cst_19 : f32 to vector<1x128xf32>
      %29 = arith.mulf %27, %28 : vector<1x128xf32>
      %30 = arith.truncf %29 : vector<1x128xf32> to vector<1x128xbf16>
      %c0_20 = arith.constant 0 : index
      %c0_21 = arith.constant 0 : index
      %31 = vector.load %arg5[%c0_20, %c0_21] : memref<128x256xbf16, #tpu.memory_space<vmem>>, vector<128x256xbf16>
      %cst_22 = arith.constant dense<0.000000e+00> : vector<1x256xf32>
      %32 = tpu.matmul %30, %31, %cst_22 {dimension_numbers = #tpu.dot_dimension_numbers<[1], [0], [0], [1], [0, 0, 1, 1], [], []>} : vector<1x128xbf16>, vector<128x256xbf16>, vector<1x256xf32> -> vector<1x256xf32>
      %c0_23 = arith.constant 0 : index
      %c0_24 = arith.constant 0 : index
      %33 = vector.load %arg6[%c0_23, %c0_24] : memref<1x256xf32, #tpu.memory_space<vmem>>, vector<1x256xf32>
      %34 = arith.addf %32, %33 : vector<1x256xf32>
      %cst_25 = arith.constant 0.000000e+00 : f32
      %35 = vector.broadcast %cst_25 : f32 to vector<1x256xf32>
      %36 = arith.maximumf %34, %35 : vector<1x256xf32>
      %37 = arith.truncf %36 : vector<1x256xf32> to vector<1x256xbf16>
      %c0_26 = arith.constant 0 : index
      %c0_27 = arith.constant 0 : index
      %38 = vector.load %arg7[%c0_26, %c0_27] : memref<256x128xbf16, #tpu.memory_space<vmem>>, vector<256x128xbf16>
      %cst_28 = arith.constant dense<0.000000e+00> : vector<1x128xf32>
      %39 = tpu.matmul %37, %38, %cst_28 {dimension_numbers = #tpu.dot_dimension_numbers<[1], [0], [0], [1], [0, 0, 1, 1], [], []>} : vector<1x256xbf16>, vector<256x128xbf16>, vector<1x128xf32> -> vector<1x128xf32>
      %c0_29 = arith.constant 0 : index
      %c0_30 = arith.constant 0 : index
      %40 = vector.load %arg8[%c0_29, %c0_30] : memref<1x128xf32, #tpu.memory_space<vmem>>, vector<1x128xf32>
      %41 = arith.addf %39, %40 : vector<1x128xf32>
      %c0_31 = arith.constant 0 : index
      %c0_32 = arith.constant 0 : index
      %c0_33 = arith.constant 0 : index
      %42 = vector.load %arg9[%c0_31, %c0_32, %c0_33] : memref<1x1x128xf32, #tpu.memory_space<vmem>>, vector<1x1x128xf32>
      %43 = vector.shape_cast %42 : vector<1x1x128xf32> to vector<1x128xf32>
      %44 = vector.shape_cast %41 : vector<1x128xf32> to vector<1x1x128xf32>
      tpu.vector_store %arg9[%c0_31, %c0_32, %c0_33], %44 {strides = array<i32>} : memref<1x1x128xf32, #tpu.memory_space<vmem>>, vector<1x1x128xf32>,
    } else {
    }
    return
  }
  func.func @transform_0(%arg0: i32, %arg1: i32) -> (i32, i32, i32) {
    %c0_i32 = arith.constant 0 : i32
    %c0_i32_0 = arith.constant 0 : i32
    return %arg0, %arg1, %c0_i32 : i32, i32, i32
  }
  func.func @transform_1(%arg0: i32, %arg1: i32) -> (i32, i32) {
    %c0_i32 = arith.constant 0 : i32
    %c0_i32_0 = arith.constant 0 : i32
    %c0_i32_1 = arith.constant 0 : i32
    return %c0_i32, %c0_i32_0 : i32, i32
  }
  func.func @transform_2(%arg0: i32, %arg1: i32) -> (i32, i32) {
    %c0_i32 = arith.constant 0 : i32
    %c0_i32_0 = arith.constant 0 : i32
    %c0_i32_1 = arith.constant 0 : i32
    return %c0_i32, %c0_i32_0 : i32, i32
  }
  func.func @transform_3(%arg0: i32, %arg1: i32) -> (i32, i32) {
    %c0_i32 = arith.constant 0 : i32
    %c0_i32_0 = arith.constant 0 : i32
    %c0_i32_1 = arith.constant 0 : i32
    return %c0_i32, %c0_i32_0 : i32, i32
  }
  func.func @transform_4(%arg0: i32, %arg1: i32) -> (i32, i32) {
    %c0_i32 = arith.constant 0 : i32
    %c0_i32_0 = arith.constant 0 : i32
    %c0_i32_1 = arith.constant 0 : i32
    return %c0_i32, %c0_i32_0 : i32, i32
  }
  func.func @transform_5(%arg0: i32, %arg1: i32) -> (i32, i32) {
    %c0_i32 = arith.constant 0 : i32
    %c0_i32_0 = arith.constant 0 : i32
    %c0_i32_1 = arith.constant 0 : i32
    return %c0_i32, %c0_i32_0 : i32, i32
  }
  func.func @transform_6(%arg0: i32, %arg1: i32) -> (i32, i32) {
    %c0_i32 = arith.constant 0 : i32
    %c0_i32_0 = arith.constant 0 : i32
    %c0_i32_1 = arith.constant 0 : i32
    return %c0_i32, %c0_i32_0 : i32, i32
  }
  func.func @transform_7(%arg0: i32, %arg1: i32) -> (i32, i32, i32) {
    %c0_i32 = arith.constant 0 : i32
    %c0_i32_0 = arith.constant 0 : i32
    %c0_i32_1 = arith.constant 0 : i32
    return %arg0, %c0_i32, %c0_i32_0 : i32, i32, i32
  }
}

</mosaic_0001>

<llo_original>
// kernel: stroke_classifier_forward.1
$region0: #{stroke_classifier_forward.1}
  #allocation0 [shape = 'u32[]', space=smem, size = 0x4, offset = 0x4, fixed_abs, tag = 'smem constant byte address 0x4 - core index']
  #allocation1 [shape = 'u32[144,128]{1,0:T(1,128)}', space=vmem, size = 0x12000, scoped, tag = 'internal scratch']
  #allocation2 [shape = 'f32[8,128]{1,0:T(8,128)}', space=vmem, size = 0x1000, scoped, tag = 'scratch operand']
  %s0 = inlined_call_operand.vmem [shape: bf16[2,1024,32], index: 0, kind: input, shape index: {}]
  %s1 = inlined_call_operand.vmem [shape: bf16[32,128], index: 1, kind: input, shape index: {}]
  %s2 = inlined_call_operand.vmem [shape: f32[1,128], index: 2, kind: input, shape index: {}]
  %s3 = inlined_call_operand.vmem [shape: bf16[128,256], index: 3, kind: input, shape index: {}]
  %s4 = inlined_call_operand.vmem [shape: f32[1,256], index: 4, kind: input, shape index: {}]
  %s5 = inlined_call_operand.vmem [shape: bf16[256,128], index: 5, kind: input, shape index: {}]
  %s6 = inlined_call_operand.vmem [shape: f32[1,128], index: 6, kind: input, shape index: {}]
  %s7 = inlined_call_operand.hbm [shape: f32[2,1,128], index: 7, kind: output, shape index: {}]
  %s8 = sld [smem:[#allocation0]]
  $region69: #{stroke_classifier_forward.1} parent=0
    _
  %s10 = ssub.s32 1, %s8
  %s11 = scalar_select 0, %s10, %s8
  $region1: #{stroke_classifier_forward.1} parent=0
    #allocation3 [shape = 'u8[1024]{0}', space=vmem, size = 0x400, scoped, tag = 'output window, operand 0']
    #allocation4 [shape = 's32[2]{0}', space=sflag, size = 0x8, scoped, tag = 'scoped memory for stroke_classifier_forward.1']
    %12 = vsyncpa [#allocation4], 0
    %s13 = scalar_lea.sflag [#allocation4], 1
    %14 = vsyncpa %s13, 0
    loop: start=0, step=1, limit=4
    $region2: #{stroke_classifier_forward.1} parent=1 // loop_pre_header
      _
    $region3: #{stroke_classifier_forward.1} parent=1 // loop_header
      %s16 = sphi 0, %s20
      %p17 = scmp.ge.s32.totalorder %s16, 4
      %s23 = sphi 0, %s35
      %s24 = sphi 0, %s31
      %s25 = sphi 0, %s23
      %s26 = sphi 0, %s24
      %s27 = sphi 0, %s25
      %s28 = sphi 0, %s26
      %s40 = sphi 0, %s42
      %s43 = sphi 0, %s40
      %s44 = sphi 0, %s43
      %s60 = sphi 0, %s44
      %s64 = sphi 0, %s64
      %s66 = sphi 0, %s64
      %s67 = sphi 0, %s66
      %s81 = sphi 0, %s67
      %s85 = sphi 0, %s85
      %s87 = sphi 0, %s85
      %s88 = sphi 0, %s87
      %s102 = sphi 0, %s88
      %s106 = sphi 0, %s106
      %s108 = sphi 0, %s106
      %s109 = sphi 0, %s108
      %s123 = sphi 0, %s109
      %s127 = sphi 0, %s127
      %s129 = sphi 0, %s127
      %s130 = sphi 0, %s129
      %s144 = sphi 0, %s130
      %s148 = sphi 0, %s148
      %s150 = sphi 0, %s148
      %s151 = sphi 0, %s150
      %s165 = sphi 0, %s151
      %s169 = sphi 0, %s169
      %s171 = sphi 0, %s169
      %s172 = sphi 0, %s171
      %s186 = sphi 0, %s172
      %s192 = sphi 0, %s194
      %s195 = sphi 0, %s192
      %s196 = sphi 0, %s195
      %s212 = sphi 0, %s196
    $region4: #{stroke_classifier_forward.1} parent=1 // loop_header_branch
      %19 = sbr.rel (%p17) target = $region8
    $region5: #{stroke_classifier_forward.1} parent=1 // loop_body
      %s21 = ssub.s32 %s16, 1
      %s22 = ssub.s32 %s16, 2
      %s29 = sadd.s32 1, %s24
      %p30 = scmp.ge.s32.totalorder %s29, 1
      %s31 = scalar_select %p30, 0, %s29
      %s32 = sadd.s32 1, %s23
      %s33 = scalar_select %p30, %s32, %s23
      %p34 = scmp.ge.s32.totalorder %s33, 2
      %s35 = scalar_select %p34, 0, %s33
      %s36 = ssub.s32 %s23, %s35
      %s37 = ssub.s32 %s24, %s31
      %s38 = sor.u32 %s36, %s37
      %p39 = scmp.eq.s32.totalorder %s38, 0
      %s41 = sadd.s32 %s40, 1
      %s42 = scalar_select %p39, %s40, %s41
      %p45 = pneg %p39
      %p46 = scmp.eq.s32.totalorder %s16, 1
      %p47 = por %p45, %p46
      %p48 = scmp.ne.s32.totalorder %s40, %s43
      %p49 = scmp.eq.s32.totalorder %s16, 0
      %p50 = por %p48, %p49
      %p51 = scmp.ne.s32.totalorder %s40, %s43
      %p52 = scmp.eq.s32.totalorder %s21, 1
      %p53 = por %p51, %p52
      %p54 = scmp.ne.s32.totalorder %s43, %s44
      %p55 = scmp.eq.s32.totalorder %s21, 0
      %p56 = por %p54, %p55
      %p57 = scmp.ne.s32.totalorder %s43, %s44
      %p58 = scmp.eq.s32.totalorder %s22, 1
      %p59 = por %p57, %p58
      %p61 = scmp.ne.s32.totalorder %s44, %s60
      %p62 = scmp.eq.s32.totalorder %s22, 0
      %p63 = por %p61, %p62
      %s65 = sadd.s32 %s64, 1
      %p68 = scmp.eq.s32.totalorder %s16, 1
      %p69 = scmp.ne.s32.totalorder %s64, %s66
      %p70 = scmp.eq.s32.totalorder %s16, 0
      %p71 = por %p69, %p70
      %p72 = scmp.ne.s32.totalorder %s64, %s66
      %p73 = scmp.eq.s32.totalorder %s21, 1
      %p74 = por %p72, %p73
      %p75 = scmp.ne.s32.totalorder %s66, %s67
      %p76 = scmp.eq.s32.totalorder %s21, 0
      %p77 = por %p75, %p76
      %p78 = scmp.ne.s32.totalorder %s66, %s67
      %p79 = scmp.eq.s32.totalorder %s22, 1
      %p80 = por %p78, %p79
      %p82 = scmp.ne.s32.totalorder %s67, %s81
      %p83 = scmp.eq.s32.totalorder %s22, 0
      %p84 = por %p82, %p83
      %s86 = sadd.s32 %s85, 1
      %p89 = scmp.eq.s32.totalorder %s16, 1
      %p90 = scmp.ne.s32.totalorder %s85, %s87
      %p91 = scmp.eq.s32.totalorder %s16, 0
      %p92 = por %p90, %p91
      %p93 = scmp.ne.s32.totalorder %s85, %s87
      %p94 = scmp.eq.s32.totalorder %s21, 1
      %p95 = por %p93, %p94
      %p96 = scmp.ne.s32.totalorder %s87, %s88
      %p97 = scmp.eq.s32.totalorder %s21, 0
      %p98 = por %p96, %p97
      %p99 = scmp.ne.s32.totalorder %s87, %s88
      %p100 = scmp.eq.s32.totalorder %s22, 1
      %p101 = por %p99, %p100
      %p103 = scmp.ne.s32.totalorder %s88, %s102
      %p104 = scmp.eq.s32.totalorder %s22, 0
      %p105 = por %p103, %p104
      %s107 = sadd.s32 %s106, 1
      %p110 = scmp.eq.s32.totalorder %s16, 1
      %p111 = scmp.ne.s32.totalorder %s106, %s108
      %p112 = scmp.eq.s32.totalorder %s16, 0
      %p113 = por %p111, %p112
      %p114 = scmp.ne.s32.totalorder %s106, %s108
      %p115 = scmp.eq.s32.totalorder %s21, 1
      %p116 = por %p114, %p115
      %p117 = scmp.ne.s32.totalorder %s108, %s109
      %p118 = scmp.eq.s32.totalorder %s21, 0
      %p119 = por %p117, %p118
      %p120 = scmp.ne.s32.totalorder %s108, %s109
      %p121 = scmp.eq.s32.totalorder %s22, 1
      %p122 = por %p120, %p121
      %p124 = scmp.ne.s32.totalorder %s109, %s123
      %p125 = scmp.eq.s32.totalorder %s22, 0
      %p126 = por %p124, %p125
      %s128 = sadd.s32 %s127, 1
      %p131 = scmp.eq.s32.totalorder %s16, 1
      %p132 = scmp.ne.s32.totalorder %s127, %s129
      %p133 = scmp.eq.s32.totalorder %s16, 0
      %p134 = por %p132, %p133
      %p135 = scmp.ne.s32.totalorder %s127, %s129
      %p136 = scmp.eq.s32.totalorder %s21, 1
      %p137 = por %p135, %p136
      %p138 = scmp.ne.s32.totalorder %s129, %s130
      %p139 = scmp.eq.s32.totalorder %s21, 0
      %p140 = por %p138, %p139
      %p141 = scmp.ne.s32.totalorder %s129, %s130
      %p142 = scmp.eq.s32.totalorder %s22, 1
      %p143 = por %p141, %p142
      %p145 = scmp.ne.s32.totalorder %s130, %s144
      %p146 = scmp.eq.s32.totalorder %s22, 0
      %p147 = por %p145, %p146
      %s149 = sadd.s32 %s148, 1
      %p152 = scmp.eq.s32.totalorder %s16, 1
      %p153 = scmp.ne.s32.totalorder %s148, %s150
      %p154 = scmp.eq.s32.totalorder %s16, 0
      %p155 = por %p153, %p154
      %p156 = scmp.ne.s32.totalorder %s148, %s150
      %p157 = scmp.eq.s32.totalorder %s21, 1
      %p158 = por %p156, %p157
      %p159 = scmp.ne.s32.totalorder %s150, %s151
      %p160 = scmp.eq.s32.totalorder %s21, 0
      %p161 = por %p159, %p160
      %p162 = scmp.ne.s32.totalorder %s150, %s151
      %p163 = scmp.eq.s32.totalorder %s22, 1
      %p164 = por %p162, %p163
      %p166 = scmp.ne.s32.totalorder %s151, %s165
      %p167 = scmp.eq.s32.totalorder %s22, 0
      %p168 = por %p166, %p167
      %s170 = sadd.s32 %s169, 1
      %p173 = scmp.eq.s32.totalorder %s16, 1
      %p174 = scmp.ne.s32.totalorder %s169, %s171
      %p175 = scmp.eq.s32.totalorder %s16, 0
      %p176 = por %p174, %p175
      %p177 = scmp.ne.s32.totalorder %s169, %s171
      %p178 = scmp.eq.s32.totalorder %s21, 1
      %p179 = por %p177, %p178
      %p180 = scmp.ne.s32.totalorder %s171, %s172
      %p181 = scmp.eq.s32.totalorder %s21, 0
      %p182 = por %p180, %p181
      %p183 = scmp.ne.s32.totalorder %s171, %s172
      %p184 = scmp.eq.s32.totalorder %s22, 1
      %p185 = por %p183, %p184
      %p187 = scmp.ne.s32.totalorder %s172, %s186
      %p188 = scmp.eq.s32.totalorder %s22, 0
      %p189 = por %p187, %p188
      %s190 = ssub.s32 %s23, %s35
      %p191 = scmp.eq.s32.totalorder %s190, 0
      %s193 = sadd.s32 %s192, 1
      %s194 = scalar_select %p191, %s192, %s193
      %p197 = pneg %p191
      %p198 = scmp.eq.s32.totalorder %s16, 1
      %p199 = por %p197, %p198
      %p200 = scmp.ne.s32.totalorder %s192, %s195
      %p201 = scmp.eq.s32.totalorder %s16, 0
      %p202 = por %p200, %p201
      %p203 = scmp.ne.s32.totalorder %s192, %s195
      %p204 = scmp.eq.s32.totalorder %s21, 1
      %p205 = por %p203, %p204
      %p206 = scmp.ne.s32.totalorder %s195, %s196
      %p207 = scmp.eq.s32.totalorder %s21, 0
      %p208 = por %p206, %p207
      %p209 = scmp.ne.s32.totalorder %s195, %s196
      %p210 = scmp.eq.s32.totalorder %s22, 1
      %p211 = por %p209, %p210
      %p213 = scmp.ne.s32.totalorder %s196, %s212
      %p214 = scmp.eq.s32.totalorder %s22, 0
      %p215 = por %p213, %p214
      %p216 = scmp.le.s32.totalorder 1, %s16
      %p217 = scmp.lt.s32.totalorder %s16, 3
      %p218 = pnand %p216, %p217
      %p219 = pneg %p218
      // Predicated region
      $region9: #{stroke_classifier_forward.1} parent=5 // pred_check
        _
      $region10: #{stroke_classifier_forward.1} parent=5 // pred_check_branch
        %221 = sbr.rel (%p218) target = $region12
      $region11: #{stroke_classifier_forward.1} parent=5 // pred_region
        %s222 = ssub.s32 %s16, 1
        // Predicated region
        $region13: #{stroke_classifier_forward.1} parent=11 // pred_check
          %p223 = pneg %p77
        $region14: #{stroke_classifier_forward.1} parent=11 // pred_check_branch
          %225 = sbr.rel (%p223) target = $region16
        $region15: #{stroke_classifier_forward.1} parent=11 // pred_region
          _
        $region16: #{stroke_classifier_forward.1} parent=11 // pred_fallthru
          _
        // Predicated region
        $region17: #{stroke_classifier_forward.1} parent=11 // pred_check
          %p226 = pneg %p98
        $region18: #{stroke_classifier_forward.1} parent=11 // pred_check_branch
          %228 = sbr.rel (%p226) target = $region20
        $region19: #{stroke_classifier_forward.1} parent=11 // pred_region
          _
        $region20: #{stroke_classifier_forward.1} parent=11 // pred_fallthru
          _
        // Predicated region
        $region21: #{stroke_classifier_forward.1} parent=11 // pred_check
          %p229 = pneg %p119
        $region22: #{stroke_classifier_forward.1} parent=11 // pred_check_branch
          %231 = sbr.rel (%p229) target = $region24
        $region23: #{stroke_classifier_forward.1} parent=11 // pred_region
          _
        $region24: #{stroke_classifier_forward.1} parent=11 // pred_fallthru
          _
        // Predicated region
        $region25: #{stroke_classifier_forward.1} parent=11 // pred_check
          %p232 = pneg %p140
        $region26: #{stroke_classifier_forward.1} parent=11 // pred_check_branch
          %234 = sbr.rel (%p232) target = $region28
        $region27: #{stroke_classifier_forward.1} parent=11 // pred_region
          _
        $region28: #{stroke_classifier_forward.1} parent=11 // pred_fallthru
          _
        // Predicated region
        $region29: #{stroke_classifier_forward.1} parent=11 // pred_check
          %p235 = pneg %p161
        $region30: #{stroke_classifier_forward.1} parent=11 // pred_check_branch
          %237 = sbr.rel (%p235) target = $region32
        $region31: #{stroke_classifier_forward.1} parent=11 // pred_region
          _
        $region32: #{stroke_classifier_forward.1} parent=11 // pred_fallthru
          _
        // Predicated region
        $region33: #{stroke_classifier_forward.1} parent=11 // pred_check
          %p238 = pneg %p182
        $region34: #{stroke_classifier_forward.1} parent=11 // pred_check_branch
          %240 = sbr.rel (%p238) target = $region36
        $region35: #{stroke_classifier_forward.1} parent=11 // pred_region
          _
        $region36: #{stroke_classifier_forward.1} parent=11 // pred_fallthru
          _
      $region12: #{stroke_classifier_forward.1} parent=5 // pred_fallthru
        _
      %p241 = scmp.lt.s32.totalorder %s16, 2
      // Predicated region
      $region37: #{stroke_classifier_forward.1} parent=5 // pred_check
        %p242 = pneg %p241
      $region38: #{stroke_classifier_forward.1} parent=5 // pred_check_branch
        %244 = sbr.rel (%p242) target = $region40
      $region39: #{stroke_classifier_forward.1} parent=5 // pred_region
        // Predicated region
        $region41: #{stroke_classifier_forward.1} parent=39 // pred_check
          %p245 = pneg %p50
        $region42: #{stroke_classifier_forward.1} parent=39 // pred_check_branch
          %247 = sbr.rel (%p245) target = $region44
        $region43: #{stroke_classifier_forward.1} parent=39 // pred_region
          %s248 = smul.u32 128, %s24
          %p249 = scmp.lt.s32.totalorder %s23, 1
          %s250 = scalar_select %p249, %s23, 1
          %p251 = scmp.lt.s32.totalorder %s248, 127
          %s252 = scalar_select %p251, %s248, 127
          %s253 = smul.addr %s250, 128
          %s254 = sadd.s32 %s252, %s253
          %s255 = smul.addr %s254, 4
          %s256 = scalar_lea.vmem %s0, %s255
          %s257 = smul.u32 128, %s24
        $region44: #{stroke_classifier_forward.1} parent=39 // pred_fallthru
          _
      $region40: #{stroke_classifier_forward.1} parent=5 // pred_fallthru
        _
      %p258 = scmp.le.s32.totalorder 1, %s16
      %p259 = scmp.lt.s32.totalorder %s16, 3
      %p260 = pnand %p258, %p259
      %p261 = pneg %p260
      // Predicated region
      $region45: #{stroke_classifier_forward.1} parent=5 // pred_check
        _
      $region46: #{stroke_classifier_forward.1} parent=5 // pred_check_branch
        %263 = sbr.rel (%p260) target = $region48
      $region47: #{stroke_classifier_forward.1} parent=5 // pred_region
        %s264 = ssub.s32 %s16, 1
        %s265 = smul.u32 128, %s26
        %p266 = scmp.lt.s32.totalorder %s25, 1
        %s267 = scalar_select %p266, %s25, 1
        %p268 = scmp.lt.s32.totalorder %s265, 127
        %s269 = scalar_select %p268, %s265, 127
        %s270 = smul.addr %s267, 128
        %s271 = sadd.s32 %s269, %s270
        %s272 = smul.addr %s271, 4
        %s273 = scalar_lea.vmem %s0, %s272
        %p274 = pneg %p56
        %p275 = pneg %p53
        %p276 = pneg %p77
        %p277 = pneg %p74
        %p278 = pneg %p98
        %p279 = pneg %p95
        %p280 = pneg %p119
        %p281 = pneg %p116
        %p282 = pneg %p140
        %p283 = pneg %p137
        %p284 = pneg %p161
        %p285 = pneg %p158
        %p286 = pneg %p182
        %p287 = pneg %p179
        %p288 = pneg %p208
        %p289 = pneg %p205
        %s290 = sand.u32 %s195, 1
        %s291 = scalar_lea.sflag [#allocation4], %s290
        %s292 = sand.u32 %s195, 1
        %s293 = scalar_lea.vmem [#allocation3], %s292
        %s294 = smul.u32 128, %s26
        %p295 = scmp.lt.s32.totalorder %s25, 1
        %s296 = scalar_select %p295, %s25, 1
        %p297 = scmp.lt.s32.totalorder %s294, 127
        %s298 = scalar_select %p297, %s294, 127
        %s299 = smul.addr %s296, 128
        %s300 = sadd.s32 %s298, %s299
        %s301 = smul.addr %s300, 4
        %s302 = scalar_lea.vmem %s0, %s301
        %s303 = smul.u32 128, %s26
        %p305 = scmp.eq.s32.totalorder %s26, 0
        // Predicated region
        $region49: #{stroke_classifier_forward.1} parent=47 // pred_check
          %p306 = pneg %p305
        $region50: #{stroke_classifier_forward.1} parent=47 // pred_check_branch
          %308 = sbr.rel (%p306) target = $region52
        $region51: #{stroke_classifier_forward.1} parent=47 // pred_region
          %309 = vst [vmem:[#allocation2] sm:$0xff] 0.0
        $region52: #{stroke_classifier_forward.1} parent=47 // pred_fallthru
          _
        %v310 = vld [vmem:[%s302] sm:$0xf]
        %v311 = vld [vmem:[%s302 + $0x4] sm:$0xf]
        %v312 = vld [vmem:[%s302 + $0x8] sm:$0xf]
        %v313 = vld [vmem:[%s302 + $0xc] sm:$0xf]
        %v314 = vld [vmem:[%s302 + $0x10] sm:$0xf]
        %v315 = vld [vmem:[%s302 + $0x14] sm:$0xf]
        %v316 = vld [vmem:[%s302 + $0x18] sm:$0xf]
        %v317 = vld [vmem:[%s302 + $0x1c] sm:$0xf]
        %v318 = vld [vmem:[%s302 + $0x20] sm:$0xf]
        %v319 = vld [vmem:[%s302 + $0x24] sm:$0xf]
        %v320 = vld [vmem:[%s302 + $0x28] sm:$0xf]
        %v321 = vld [vmem:[%s302 + $0x2c] sm:$0xf]
        %v322 = vld [vmem:[%s302 + $0x30] sm:$0xf]
        %v323 = vld [vmem:[%s302 + $0x34] sm:$0xf]
        %v324 = vld [vmem:[%s302 + $0x38] sm:$0xf]
        %v325 = vld [vmem:[%s302 + $0x3c] sm:$0xf]
        %v326 = vld [vmem:[%s302 + $0x40] sm:$0xf]
        %v327 = vld [vmem:[%s302 + $0x44] sm:$0xf]
        %v328 = vld [vmem:[%s302 + $0x48] sm:$0xf]
        %v329 = vld [vmem:[%s302 + $0x4c] sm:$0xf]
        %v330 = vld [vmem:[%s302 + $0x50] sm:$0xf]
        %v331 = vld [vmem:[%s302 + $0x54] sm:$0xf]
        %v332 = vld [vmem:[%s302 + $0x58] sm:$0xf]
        %v333 = vld [vmem:[%s302 + $0x5c] sm:$0xf]
        %v334 = vld [vmem:[%s302 + $0x60] sm:$0xf]
        %v335 = vld [vmem:[%s302 + $0x64] sm:$0xf]
        %v336 = vld [vmem:[%s302 + $0x68] sm:$0xf]
        %v337 = vld [vmem:[%s302 + $0x6c] sm:$0xf]
        %v338 = vld [vmem:[%s302 + $0x70] sm:$0xf]
        %v339 = vld [vmem:[%s302 + $0x74] sm:$0xf]
        %v340 = vld [vmem:[%s302 + $0x78] sm:$0xf]
        %v341 = vld [vmem:[%s302 + $0x7c] sm:$0xf]
        %v342 = vld [vmem:[%s302 + $0x80] sm:$0xf]
        %v343 = vld [vmem:[%s302 + $0x84] sm:$0xf]
        %v344 = vld [vmem:[%s302 + $0x88] sm:$0xf]
        %v345 = vld [vmem:[%s302 + $0x8c] sm:$0xf]
        %v346 = vld [vmem:[%s302 + $0x90] sm:$0xf]
        %v347 = vld [vmem:[%s302 + $0x94] sm:$0xf]
        %v348 = vld [vmem:[%s302 + $0x98] sm:$0xf]
        %v349 = vld [vmem:[%s302 + $0x9c] sm:$0xf]
        %v350 = vld [vmem:[%s302 + $0xa0] sm:$0xf]
        %v351 = vld [vmem:[%s302 + $0xa4] sm:$0xf]
        %v352 = vld [vmem:[%s302 + $0xa8] sm:$0xf]
        %v353 = vld [vmem:[%s302 + $0xac] sm:$0xf]
        %v354 = vld [vmem:[%s302 + $0xb0] sm:$0xf]
        %v355 = vld [vmem:[%s302 + $0xb4] sm:$0xf]
        %v356 = vld [vmem:[%s302 + $0xb8] sm:$0xf]
        %v357 = vld [vmem:[%s302 + $0xbc] sm:$0xf]
        %v358 = vld [vmem:[%s302 + $0xc0] sm:$0xf]
        %v359 = vld [vmem:[%s302 + $0xc4] sm:$0xf]
        %v360 = vld [vmem:[%s302 + $0xc8] sm:$0xf]
        %v361 = vld [vmem:[%s302 + $0xcc] sm:$0xf]
        %v362 = vld [vmem:[%s302 + $0xd0] sm:$0xf]
        %v363 = vld [vmem:[%s302 + $0xd4] sm:$0xf]
        %v364 = vld [vmem:[%s302 + $0xd8] sm:$0xf]
        %v365 = vld [vmem:[%s302 + $0xdc] sm:$0xf]
        %v366 = vld [vmem:[%s302 + $0xe0] sm:$0xf]
        %v367 = vld [vmem:[%s302 + $0xe4] sm:$0xf]
        %v368 = vld [vmem:[%s302 + $0xe8] sm:$0xf]
        %v369 = vld [vmem:[%s302 + $0xec] sm:$0xf]
        %v370 = vld [vmem:[%s302 + $0xf0] sm:$0xf]
        %v371 = vld [vmem:[%s302 + $0xf4] sm:$0xf]
        %v372 = vld [vmem:[%s302 + $0xf8] sm:$0xf]
        %v373 = vld [vmem:[%s302 + $0xfc] sm:$0xf]
        %v374 = vld [vmem:[%s302 + $0x100] sm:$0xf]
        %v375 = vld [vmem:[%s302 + $0x104] sm:$0xf]
        %v376 = vld [vmem:[%s302 + $0x108] sm:$0xf]
        %v377 = vld [vmem:[%s302 + $0x10c] sm:$0xf]
        %v378 = vld [vmem:[%s302 + $0x110] sm:$0xf]
        %v379 = vld [vmem:[%s302 + $0x114] sm:$0xf]
        %v380 = vld [vmem:[%s302 + $0x118] sm:$0xf]
        %v381 = vld [vmem:[%s302 + $0x11c] sm:$0xf]
        %v382 = vld [vmem:[%s302 + $0x120] sm:$0xf]
        %v383 = vld [vmem:[%s302 + $0x124] sm:$0xf]
        %v384 = vld [vmem:[%s302 + $0x128] sm:$0xf]
        %v385 = vld [vmem:[%s302 + $0x12c] sm:$0xf]
        %v386 = vld [vmem:[%s302 + $0x130] sm:$0xf]
        %v387 = vld [vmem:[%s302 + $0x134] sm:$0xf]
        %v388 = vld [vmem:[%s302 + $0x138] sm:$0xf]
        %v389 = vld [vmem:[%s302 + $0x13c] sm:$0xf]
        %v390 = vld [vmem:[%s302 + $0x140] sm:$0xf]
        %v391 = vld [vmem:[%s302 + $0x144] sm:$0xf]
        %v392 = vld [vmem:[%s302 + $0x148] sm:$0xf]
        %v393 = vld [vmem:[%s302 + $0x14c] sm:$0xf]
        %v394 = vld [vmem:[%s302 + $0x150] sm:$0xf]
        %v395 = vld [vmem:[%s302 + $0x154] sm:$0xf]
        %v396 = vld [vmem:[%s302 + $0x158] sm:$0xf]
        %v397 = vld [vmem:[%s302 + $0x15c] sm:$0xf]
        %v398 = vld [vmem:[%s302 + $0x160] sm:$0xf]
        %v399 = vld [vmem:[%s302 + $0x164] sm:$0xf]
        %v400 = vld [vmem:[%s302 + $0x168] sm:$0xf]
        %v401 = vld [vmem:[%s302 + $0x16c] sm:$0xf]
        %v402 = vld [vmem:[%s302 + $0x170] sm:$0xf]
        %v403 = vld [vmem:[%s302 + $0x174] sm:$0xf]
        %v404 = vld [vmem:[%s302 + $0x178] sm:$0xf]
        %v405 = vld [vmem:[%s302 + $0x17c] sm:$0xf]
        %v406 = vld [vmem:[%s302 + $0x180] sm:$0xf]
        %v407 = vld [vmem:[%s302 + $0x184] sm:$0xf]
        %v408 = vld [vmem:[%s302 + $0x188] sm:$0xf]
        %v409 = vld [vmem:[%s302 + $0x18c] sm:$0xf]
        %v410 = vld [vmem:[%s302 + $0x190] sm:$0xf]
        %v411 = vld [vmem:[%s302 + $0x194] sm:$0xf]
        %v412 = vld [vmem:[%s302 + $0x198] sm:$0xf]
        %v413 = vld [vmem:[%s302 + $0x19c] sm:$0xf]
        %v414 = vld [vmem:[%s302 + $0x1a0] sm:$0xf]
        %v415 = vld [vmem:[%s302 + $0x1a4] sm:$0xf]
        %v416 = vld [vmem:[%s302 + $0x1a8] sm:$0xf]
        %v417 = vld [vmem:[%s302 + $0x1ac] sm:$0xf]
        %v418 = vld [vmem:[%s302 + $0x1b0] sm:$0xf]
        %v419 = vld [vmem:[%s302 + $0x1b4] sm:$0xf]
        %v420 = vld [vmem:[%s302 + $0x1b8] sm:$0xf]
        %v421 = vld [vmem:[%s302 + $0x1bc] sm:$0xf]
        %v422 = vld [vmem:[%s302 + $0x1c0] sm:$0xf]
        %v423 = vld [vmem:[%s302 + $0x1c4] sm:$0xf]
        %v424 = vld [vmem:[%s302 + $0x1c8] sm:$0xf]
        %v425 = vld [vmem:[%s302 + $0x1cc] sm:$0xf]
        %v426 = vld [vmem:[%s302 + $0x1d0] sm:$0xf]
        %v427 = vld [vmem:[%s302 + $0x1d4] sm:$0xf]
        %v428 = vld [vmem:[%s302 + $0x1d8] sm:$0xf]
        %v429 = vld [vmem:[%s302 + $0x1dc] sm:$0xf]
        %v430 = vld [vmem:[%s302 + $0x1e0] sm:$0xf]
        %v431 = vld [vmem:[%s302 + $0x1e4] sm:$0xf]
        %v432 = vld [vmem:[%s302 + $0x1e8] sm:$0xf]
        %v433 = vld [vmem:[%s302 + $0x1ec] sm:$0xf]
        %v434 = vld [vmem:[%s302 + $0x1f0] sm:$0xf]
        %v435 = vld [vmem:[%s302 + $0x1f4] sm:$0xf]
        %v436 = vld [vmem:[%s302 + $0x1f8] sm:$0xf]
        %v437 = vld [vmem:[%s302 + $0x1fc] sm:$0xf]
        %v438 = vld [vmem:[%s1] sm:$0xf]
        %v439 = vld [vmem:[%s1 + $0x4] sm:$0xf]
        %v440 = vld [vmem:[%s1 + $0x8] sm:$0xf]
        %v441 = vld [vmem:[%s1 + $0xc] sm:$0xf]
        %v442 = vld [vmem:[%s2] sm:$0x1]
        %v444 = vlaneseq
        %v445 = vshrl.u32 %v444, 7
        %v446 = vsub.s32 0, %v445
        %v447 = vrot.slane %v442, %v446
        %v577 = vunpack.c.l.b16 %v310
        %v578 = vunpack.c.l.b16 %v311
        %v579 = vunpack.c.l.b16 %v312
        %v580 = vunpack.c.l.b16 %v313
        %v581 = vunpack.c.l.b16 %v314
        %v582 = vunpack.c.l.b16 %v315
        %v583 = vunpack.c.l.b16 %v316
        %v584 = vunpack.c.l.b16 %v317
        %v585 = vunpack.c.l.b16 %v318
        %v586 = vunpack.c.l.b16 %v319
        %v587 = vunpack.c.l.b16 %v320
        %v588 = vunpack.c.l.b16 %v321
        %v589 = vunpack.c.l.b16 %v322
        %v590 = vunpack.c.l.b16 %v323
        %v591 = vunpack.c.l.b16 %v324
        %v592 = vunpack.c.l.b16 %v325
        %v593 = vunpack.c.l.b16 %v326
        %v594 = vunpack.c.l.b16 %v327
        %v595 = vunpack.c.l.b16 %v328
        %v596 = vunpack.c.l.b16 %v329
        %v597 = vunpack.c.l.b16 %v330
        %v598 = vunpack.c.l.b16 %v331
        %v599 = vunpack.c.l.b16 %v332
        %v600 = vunpack.c.l.b16 %v333
        %v601 = vunpack.c.l.b16 %v334
        %v602 = vunpack.c.l.b16 %v335
        %v603 = vunpack.c.l.b16 %v336
        %v604 = vunpack.c.l.b16 %v337
        %v605 = vunpack.c.l.b16 %v338
        %v606 = vunpack.c.l.b16 %v339
        %v607 = vunpack.c.l.b16 %v340
        %v608 = vunpack.c.l.b16 %v341
        %v609 = vunpack.c.l.b16 %v342
        %v610 = vunpack.c.l.b16 %v343
        %v611 = vunpack.c.l.b16 %v344
        %v612 = vunpack.c.l.b16 %v345
        %v613 = vunpack.c.l.b16 %v346
        %v614 = vunpack.c.l.b16 %v347
        %v615 = vunpack.c.l.b16 %v348
        %v616 = vunpack.c.l.b16 %v349
        %v617 = vunpack.c.l.b16 %v350
        %v618 = vunpack.c.l.b16 %v351
        %v619 = vunpack.c.l.b16 %v352
        %v620 = vunpack.c.l.b16 %v353
        %v621 = vunpack.c.l.b16 %v354
        %v622 = vunpack.c.l.b16 %v355
        %v623 = vunpack.c.l.b16 %v356
        %v624 = vunpack.c.l.b16 %v357
        %v625 = vunpack.c.l.b16 %v358
        %v626 = vunpack.c.l.b16 %v359
        %v627 = vunpack.c.l.b16 %v360
        %v628 = vunpack.c.l.b16 %v361
        %v629 = vunpack.c.l.b16 %v362
        %v630 = vunpack.c.l.b16 %v363
        %v631 = vunpack.c.l.b16 %v364
        %v632 = vunpack.c.l.b16 %v365
        %v633 = vunpack.c.l.b16 %v366
        %v634 = vunpack.c.l.b16 %v367
        %v635 = vunpack.c.l.b16 %v368
        %v636 = vunpack.c.l.b16 %v369
        %v637 = vunpack.c.l.b16 %v370
        %v638 = vunpack.c.l.b16 %v371
        %v639 = vunpack.c.l.b16 %v372
        %v640 = vunpack.c.l.b16 %v373
        %v641 = vunpack.c.l.b16 %v374
        %v642 = vunpack.c.l.b16 %v375
        %v643 = vunpack.c.l.b16 %v376
        %v644 = vunpack.c.l.b16 %v377
        %v645 = vunpack.c.l.b16 %v378
        %v646 = vunpack.c.l.b16 %v379
        %v647 = vunpack.c.l.b16 %v380
        %v648 = vunpack.c.l.b16 %v381
        %v649 = vunpack.c.l.b16 %v382
        %v650 = vunpack.c.l.b16 %v383
        %v651 = vunpack.c.l.b16 %v384
        %v652 = vunpack.c.l.b16 %v385
        %v653 = vunpack.c.l.b16 %v386
        %v654 = vunpack.c.l.b16 %v387
        %v655 = vunpack.c.l.b16 %v388
        %v656 = vunpack.c.l.b16 %v389
        %v657 = vunpack.c.l.b16 %v390
        %v658 = vunpack.c.l.b16 %v391
        %v659 = vunpack.c.l.b16 %v392
        %v660 = vunpack.c.l.b16 %v393
        %v661 = vunpack.c.l.b16 %v394
        %v662 = vunpack.c.l.b16 %v395
        %v663 = vunpack.c.l.b16 %v396
        %v664 = vunpack.c.l.b16 %v397
        %v665 = vunpack.c.l.b16 %v398
        %v666 = vunpack.c.l.b16 %v399
        %v667 = vunpack.c.l.b16 %v400
        %v668 = vunpack.c.l.b16 %v401
        %v669 = vunpack.c.l.b16 %v402
        %v670 = vunpack.c.l.b16 %v403
        %v671 = vunpack.c.l.b16 %v404
        %v672 = vunpack.c.l.b16 %v405
        %v673 = vunpack.c.l.b16 %v406
        %v674 = vunpack.c.l.b16 %v407
        %v675 = vunpack.c.l.b16 %v408
        %v676 = vunpack.c.l.b16 %v409
        %v677 = vunpack.c.l.b16 %v410
        %v678 = vunpack.c.l.b16 %v411
        %v679 = vunpack.c.l.b16 %v412
        %v680 = vunpack.c.l.b16 %v413
        %v681 = vunpack.c.l.b16 %v414
        %v682 = vunpack.c.l.b16 %v415
        %v683 = vunpack.c.l.b16 %v416
        %v684 = vunpack.c.l.b16 %v417
        %v685 = vunpack.c.l.b16 %v418
        %v686 = vunpack.c.l.b16 %v419
        %v687 = vunpack.c.l.b16 %v420
        %v688 = vunpack.c.l.b16 %v421
        %v689 = vunpack.c.l.b16 %v422
        %v690 = vunpack.c.l.b16 %v423
        %v691 = vunpack.c.l.b16 %v424
        %v692 = vunpack.c.l.b16 %v425
        %v693 = vunpack.c.l.b16 %v426
        %v694 = vunpack.c.l.b16 %v427
        %v695 = vunpack.c.l.b16 %v428
        %v696 = vunpack.c.l.b16 %v429
        %v697 = vunpack.c.l.b16 %v430
        %v698 = vunpack.c.l.b16 %v431
        %v699 = vunpack.c.l.b16 %v432
        %v700 = vunpack.c.l.b16 %v433
        %v701 = vunpack.c.l.b16 %v434
        %v702 = vunpack.c.l.b16 %v435
        %v703 = vunpack.c.l.b16 %v436
        %v704 = vunpack.c.l.b16 %v437
        %v705 = vpack.c.b16 %v578, %v577
        %v706 = vpack.c.b16 %v580, %v579
        %v707 = vpack.c.b16 %v582, %v581
        %v708 = vpack.c.b16 %v584, %v583
        %v709 = vpack.c.b16 %v586, %v585
        %v710 = vpack.c.b16 %v588, %v587
        %v711 = vpack.c.b16 %v590, %v589
        %v712 = vpack.c.b16 %v592, %v591
        %v713 = vpack.c.b16 %v594, %v593
        %v714 = vpack.c.b16 %v596, %v595
        %v715 = vpack.c.b16 %v598, %v597
        %v716 = vpack.c.b16 %v600, %v599
        %v717 = vpack.c.b16 %v602, %v601
        %v718 = vpack.c.b16 %v604, %v603
        %v719 = vpack.c.b16 %v606, %v605
        %v720 = vpack.c.b16 %v608, %v607
        %v721 = vpack.c.b16 %v610, %v609
        %v722 = vpack.c.b16 %v612, %v611
        %v723 = vpack.c.b16 %v614, %v613
        %v724 = vpack.c.b16 %v616, %v615
        %v725 = vpack.c.b16 %v618, %v617
        %v726 = vpack.c.b16 %v620, %v619
        %v727 = vpack.c.b16 %v622, %v621
        %v728 = vpack.c.b16 %v624, %v623
        %v729 = vpack.c.b16 %v626, %v625
        %v730 = vpack.c.b16 %v628, %v627
        %v731 = vpack.c.b16 %v630, %v629
        %v732 = vpack.c.b16 %v632, %v631
        %v733 = vpack.c.b16 %v634, %v633
        %v734 = vpack.c.b16 %v636, %v635
        %v735 = vpack.c.b16 %v638, %v637
        %v736 = vpack.c.b16 %v640, %v639
        %v737 = vpack.c.b16 %v642, %v641
        %v738 = vpack.c.b16 %v644, %v643
        %v739 = vpack.c.b16 %v646, %v645
        %v740 = vpack.c.b16 %v648, %v647
        %v741 = vpack.c.b16 %v650, %v649
        %v742 = vpack.c.b16 %v652, %v651
        %v743 = vpack.c.b16 %v654, %v653
        %v744 = vpack.c.b16 %v656, %v655
        %v745 = vpack.c.b16 %v658, %v657
        %v746 = vpack.c.b16 %v660, %v659
        %v747 = vpack.c.b16 %v662, %v661
        %v748 = vpack.c.b16 %v664, %v663
        %v749 = vpack.c.b16 %v666, %v665
        %v750 = vpack.c.b16 %v668, %v667
        %v751 = vpack.c.b16 %v670, %v669
        %v752 = vpack.c.b16 %v672, %v671
        %v753 = vpack.c.b16 %v674, %v673
        %v754 = vpack.c.b16 %v676, %v675
        %v755 = vpack.c.b16 %v678, %v677
        %v756 = vpack.c.b16 %v680, %v679
        %v757 = vpack.c.b16 %v682, %v681
        %v758 = vpack.c.b16 %v684, %v683
        %v759 = vpack.c.b16 %v686, %v685
        %v760 = vpack.c.b16 %v688, %v687
        %v761 = vpack.c.b16 %v690, %v689
        %v762 = vpack.c.b16 %v692, %v691
        %v763 = vpack.c.b16 %v694, %v693
        %v764 = vpack.c.b16 %v696, %v695
        %v765 = vpack.c.b16 %v698, %v697
        %v766 = vpack.c.b16 %v700, %v699
        %v767 = vpack.c.b16 %v702, %v701
        %v768 = vpack.c.b16 %v704, %v703
        %v773 = vunpack.c.l.b16 %v438
        %v774 = vunpack.c.l.b16 %v439
        %v775 = vunpack.c.l.b16 %v440
        %v776 = vunpack.c.l.b16 %v441
        %v777 = vpack.c.b16 %v774, %v773
        %v778 = vpack.c.b16 %v776, %v775
        %vm781 = vcmask 261120
        %v783 = vsel %vm781, %v705, 0
        %v786 = vsel %vm781, %v706, 0
        %v789 = vsel %vm781, %v707, 0
        %v792 = vsel %vm781, %v708, 0
        %v795 = vsel %vm781, %v709, 0
        %v798 = vsel %vm781, %v710, 0
        %v801 = vsel %vm781, %v711, 0
        %v804 = vsel %vm781, %v712, 0
        %v807 = vsel %vm781, %v713, 0
        %v810 = vsel %vm781, %v714, 0
        %v813 = vsel %vm781, %v715, 0
        %v816 = vsel %vm781, %v716, 0
        %v819 = vsel %vm781, %v717, 0
        %v822 = vsel %vm781, %v718, 0
        %v825 = vsel %vm781, %v719, 0
        %v828 = vsel %vm781, %v720, 0
        %v831 = vsel %vm781, %v721, 0
        %v834 = vsel %vm781, %v722, 0
        %v837 = vsel %vm781, %v723, 0
        %v840 = vsel %vm781, %v724, 0
        %v843 = vsel %vm781, %v725, 0
        %v846 = vsel %vm781, %v726, 0
        %v849 = vsel %vm781, %v727, 0
        %v852 = vsel %vm781, %v728, 0
        %v855 = vsel %vm781, %v729, 0
        %v858 = vsel %vm781, %v730, 0
        %v861 = vsel %vm781, %v731, 0
        %v864 = vsel %vm781, %v732, 0
        %v867 = vsel %vm781, %v733, 0
        %v870 = vsel %vm781, %v734, 0
        %v873 = vsel %vm781, %v735, 0
        %v876 = vsel %vm781, %v736, 0
        %v879 = vsel %vm781, %v737, 0
        %v882 = vsel %vm781, %v738, 0
        %v885 = vsel %vm781, %v739, 0
        %v888 = vsel %vm781, %v740, 0
        %v891 = vsel %vm781, %v741, 0
        %v894 = vsel %vm781, %v742, 0
        %v897 = vsel %vm781, %v743, 0
        %v900 = vsel %vm781, %v744, 0
        %v903 = vsel %vm781, %v745, 0
        %v906 = vsel %vm781, %v746, 0
        %v909 = vsel %vm781, %v747, 0
        %v912 = vsel %vm781, %v748, 0
        %v915 = vsel %vm781, %v749, 0
        %v918 = vsel %vm781, %v750, 0
        %v921 = vsel %vm781, %v751, 0
        %v924 = vsel %vm781, %v752, 0
        %v927 = vsel %vm781, %v753, 0
        %v930 = vsel %vm781, %v754, 0
        %v933 = vsel %vm781, %v755, 0
        %v936 = vsel %vm781, %v756, 0
        %v939 = vsel %vm781, %v757, 0
        %v942 = vsel %vm781, %v758, 0
        %v945 = vsel %vm781, %v759, 0
        %v948 = vsel %vm781, %v760, 0
        %v951 = vsel %vm781, %v761, 0
        %v954 = vsel %vm781, %v762, 0
        %v957 = vsel %vm781, %v763, 0
        %v960 = vsel %vm781, %v764, 0
        %v963 = vsel %vm781, %v765, 0
        %v966 = vsel %vm781, %v766, 0
        %v969 = vsel %vm781, %v767, 0
        %v972 = vsel %vm781, %v768, 0
        %974 = vmatprep.subr.bf16.mxu0 0
        %975 = vmatpush1.bf16.msra.mxu0 %v777
        %976 = vmatprep.subr.bf16.mxu0 0
        %977 = vmatpush1.bf16.msra.mxu0 %v778
        %978 = vmatprep.subr.bf16.mxu0 0
        %979 = vmatpush1.bf16.msra.mxu0 0
        %980 = vmatprep.subr.bf16.mxu0 0
        %981 = vmatpush1.bf16.msra.mxu0 0
        %982 = vmatprep.subr.bf16.mxu0 0
        %983 = vmatpush1.bf16.msra.mxu0 0
        %984 = vmatprep.subr.bf16.mxu0 0
        %985 = vmatpush1.bf16.msra.mxu0 0
        %986 = vmatprep.subr.bf16.mxu0 0
        %987 = vmatpush1.bf16.msra.mxu0 0
        %988 = vmatprep.subr.bf16.mxu0 0
        %989 = vmatpush1.bf16.msra.mxu0 0
        %990 = vmatprep.subr.bf16.mxu0 0
        %991 = vmatpush1.bf16.msra.mxu0 0
        %992 = vmatprep.subr.bf16.mxu0 0
        %993 = vmatpush1.bf16.msra.mxu0 0
        %994 = vmatprep.subr.bf16.mxu0 0
        %995 = vmatpush1.bf16.msra.mxu0 0
        %996 = vmatprep.subr.bf16.mxu0 0
        %997 = vmatpush1.bf16.msra.mxu0 0
        %998 = vmatprep.subr.bf16.mxu0 0
        %999 = vmatpush1.bf16.msra.mxu0 0
        %1000 = vmatprep.subr.bf16.mxu0 0
        %1001 = vmatpush1.bf16.msra.mxu0 0
        %1002 = vmatprep.subr.bf16.mxu0 0
        %1003 = vmatpush1.bf16.msra.mxu0 0
        %1004 = vmatprep.subr.bf16.mxu0 0
        %1005 = vmatpush1.bf16.msra.mxu0 0
        %1006 = vmatprep.mubr.bf16.mxu0 0
        %1007 = vmatmul.mubr.bf16.gmra.mrb[0].mxu0 %v783
        %v1008 = vpop.f32.mrb[0].mxu0
        %v1009 = vadd.f32 %v447, %v1008
        %v1010 = vpop.f32.mrb[0].mxu0
        %v1011 = vpop.f32.mrb[0].mxu0
        %v1012 = vadd.f32 %v447, %v1011
        %v1013 = vpop.f32.mrb[0].mxu0
        %1014 = vmatprep.mubr.bf16.mxu0 0
        %1015 = vmatmul.mubr.bf16.gmra.mrb[0].mxu0 %v786
        %v1016 = vpop.f32.mrb[0].mxu0
        %v1017 = vadd.f32 %v447, %v1016
        %v1018 = vpop.f32.mrb[0].mxu0
        %v1019 = vpop.f32.mrb[0].mxu0
        %v1020 = vadd.f32 %v447, %v1019
        %v1021 = vpop.f32.mrb[0].mxu0
        %1022 = vmatprep.mubr.bf16.mxu0 0
        %1023 = vmatmul.mubr.bf16.gmra.mrb[0].mxu0 %v789
        %v1024 = vpop.f32.mrb[0].mxu0
        %v1025 = vadd.f32 %v447, %v1024
        %v1026 = vpop.f32.mrb[0].mxu0
        %v1027 = vpop.f32.mrb[0].mxu0
        %v1028 = vadd.f32 %v447, %v1027
        %v1029 = vpop.f32.mrb[0].mxu0
        %1030 = vmatprep.mubr.bf16.mxu0 0
        %1031 = vmatmul.mubr.bf16.gmra.mrb[0].mxu0 %v792
        %v1032 = vpop.f32.mrb[0].mxu0
        %v1033 = vadd.f32 %v447, %v1032
        %v1034 = vpop.f32.mrb[0].mxu0
        %v1035 = vpop.f32.mrb[0].mxu0
        %v1036 = vadd.f32 %v447, %v1035
        %v1037 = vpop.f32.mrb[0].mxu0
        %1038 = vmatprep.mubr.bf16.mxu0 0
        %1039 = vmatmul.mubr.bf16.gmra.mrb[0].mxu0 %v795
        %v1040 = vpop.f32.mrb[0].mxu0
        %v1041 = vadd.f32 %v447, %v1040
        %v1042 = vpop.f32.mrb[0].mxu0
        %v1043 = vpop.f32.mrb[0].mxu0
        %v1044 = vadd.f32 %v447, %v1043
        %v1045 = vpop.f32.mrb[0].mxu0
        %1046 = vmatprep.mubr.bf16.mxu0 0
        %1047 = vmatmul.mubr.bf16.gmra.mrb[0].mxu0 %v798
        %v1048 = vpop.f32.mrb[0].mxu0
        %v1049 = vadd.f32 %v447, %v1048
        %v1050 = vpop.f32.mrb[0].mxu0
        %v1051 = vpop.f32.mrb[0].mxu0
        %v1052 = vadd.f32 %v447, %v1051
        %v1053 = vpop.f32.mrb[0].mxu0
        %1054 = vmatprep.mubr.bf16.mxu0 0
        %1055 = vmatmul.mubr.bf16.gmra.mrb[0].mxu0 %v801
        %v1056 = vpop.f32.mrb[0].mxu0
        %v1057 = vadd.f32 %v447, %v1056
        %v1058 = vpop.f32.mrb[0].mxu0
        %v1059 = vpop.f32.mrb[0].mxu0
        %v1060 = vadd.f32 %v447, %v1059
        %v1061 = vpop.f32.mrb[0].mxu0
        %1062 = vmatprep.mubr.bf16.mxu0 0
        %1063 = vmatmul.mubr.bf16.gmra.mrb[0].mxu0 %v804
        %v1064 = vpop.f32.mrb[0].mxu0
        %v1065 = vadd.f32 %v447, %v1064
        %v1066 = vpop.f32.mrb[0].mxu0
        %v1067 = vpop.f32.mrb[0].mxu0
        %v1068 = vadd.f32 %v447, %v1067
        %v1069 = vpop.f32.mrb[0].mxu0
        %1070 = vmatprep.mubr.bf16.mxu0 0
        %1071 = vmatmul.mubr.bf16.gmra.mrb[0].mxu0 %v807
        %v1072 = vpop.f32.mrb[0].mxu0
        %v1073 = vadd.f32 %v447, %v1072
        %v1074 = vpop.f32.mrb[0].mxu0
        %v1075 = vpop.f32.mrb[0].mxu0
        %v1076 = vadd.f32 %v447, %v1075
        %v1077 = vpop.f32.mrb[0].mxu0
        %1078 = vmatprep.mubr.bf16.mxu0 0
        %1079 = vmatmul.mubr.bf16.gmra.mrb[0].mxu0 %v810
        %v1080 = vpop.f32.mrb[0].mxu0
        %v1081 = vadd.f32 %v447, %v1080
        %v1082 = vpop.f32.mrb[0].mxu0
        %v1083 = vpop.f32.mrb[0].mxu0
        %v1084 = vadd.f32 %v447, %v1083
        %v1085 = vpop.f32.mrb[0].mxu0
        %1086 = vmatprep.mubr.bf16.mxu0 0
        %1087 = vmatmul.mubr.bf16.gmra.mrb[0].mxu0 %v813
        %v1088 = vpop.f32.mrb[0].mxu0
        %v1089 = vadd.f32 %v447, %v1088
        %v1090 = vpop.f32.mrb[0].mxu0
        %v1091 = vpop.f32.mrb[0].mxu0
        %v1092 = vadd.f32 %v447, %v1091
        %v1093 = vpop.f32.mrb[0].mxu0
        %1094 = vmatprep.mubr.bf16.mxu0 0
        %1095 = vmatmul.mubr.bf16.gmra.mrb[0].mxu0 %v816
        %v1096 = vpop.f32.mrb[0].mxu0
        %v1097 = vadd.f32 %v447, %v1096
        %v1098 = vpop.f32.mrb[0].mxu0
        %v1099 = vpop.f32.mrb[0].mxu0
        %v1100 = vadd.f32 %v447, %v1099
        %v1101 = vpop.f32.mrb[0].mxu0
        %1102 = vmatprep.mubr.bf16.mxu0 0
        %1103 = vmatmul.mubr.bf16.gmra.mrb[0].mxu0 %v819
        %v1104 = vpop.f32.mrb[0].mxu0
        %v1105 = vadd.f32 %v447, %v1104
        %v1106 = vpop.f32.mrb[0].mxu0
        %v1107 = vpop.f32.mrb[0].mxu0
        %v1108 = vadd.f32 %v447, %v1107
        %v1109 = vpop.f32.mrb[0].mxu0
        %1110 = vmatprep.mubr.bf16.mxu0 0
        %1111 = vmatmul.mubr.bf16.gmra.mrb[0].mxu0 %v822
        %v1112 = vpop.f32.mrb[0].mxu0
        %v1113 = vadd.f32 %v447, %v1112
        %v1114 = vpop.f32.mrb[0].mxu0
        %v1115 = vpop.f32.mrb[0].mxu0
        %v1116 = vadd.f32 %v447, %v1115
        %v1117 = vpop.f32.mrb[0].mxu0
        %1118 = vmatprep.mubr.bf16.mxu0 0
        %1119 = vmatmul.mubr.bf16.gmra.mrb[0].mxu0 %v825
        %v1120 = vpop.f32.mrb[0].mxu0
        %v1121 = vadd.f32 %v447, %v1120
        %v1122 = vpop.f32.mrb[0].mxu0
        %v1123 = vpop.f32.mrb[0].mxu0
        %v1124 = vadd.f32 %v447, %v1123
        %v1125 = vpop.f32.mrb[0].mxu0
        %1126 = vmatprep.mubr.bf16.mxu0 0
        %1127 = vmatmul.mubr.bf16.gmra.mrb[0].mxu0 %v828
        %v1128 = vpop.f32.mrb[0].mxu0
        %v1129 = vadd.f32 %v447, %v1128
        %v1130 = vpop.f32.mrb[0].mxu0
        %v1131 = vpop.f32.mrb[0].mxu0
        %v1132 = vadd.f32 %v447, %v1131
        %v1133 = vpop.f32.mrb[0].mxu0
        %1134 = vmatprep.mubr.bf16.mxu0 0
        %1135 = vmatmul.mubr.bf16.gmra.mrb[0].mxu0 %v831
        %v1136 = vpop.f32.mrb[0].mxu0
        %v1137 = vadd.f32 %v447, %v1136
        %v1138 = vpop.f32.mrb[0].mxu0
        %v1139 = vpop.f32.mrb[0].mxu0
        %v1140 = vadd.f32 %v447, %v1139
        %v1141 = vpop.f32.mrb[0].mxu0
        %1142 = vmatprep.mubr.bf16.mxu0 0
        %1143 = vmatmul.mubr.bf16.gmra.mrb[0].mxu0 %v834
        %v1144 = vpop.f32.mrb[0].mxu0
        %v1145 = vadd.f32 %v447, %v1144
        %v1146 = vpop.f32.mrb[0].mxu0
        %v1147 = vpop.f32.mrb[0].mxu0
        %v1148 = vadd.f32 %v447, %v1147
        %v1149 = vpop.f32.mrb[0].mxu0
        %1150 = vmatprep.mubr.bf16.mxu0 0
        %1151 = vmatmul.mubr.bf16.gmra.mrb[0].mxu0 %v837
        %v1152 = vpop.f32.mrb[0].mxu0
        %v1153 = vadd.f32 %v447, %v1152
        %v1154 = vpop.f32.mrb[0].mxu0
        %v1155 = vpop.f32.mrb[0].mxu0
        %v1156 = vadd.f32 %v447, %v1155
        %v1157 = vpop.f32.mrb[0].mxu0
        %1158 = vmatprep.mubr.bf16.mxu0 0
        %1159 = vmatmul.mubr.bf16.gmra.mrb[0].mxu0 %v840
        %v1160 = vpop.f32.mrb[0].mxu0
        %v1161 = vadd.f32 %v447, %v1160
        %v1162 = vpop.f32.mrb[0].mxu0
        %v1163 = vpop.f32.mrb[0].mxu0
        %v1164 = vadd.f32 %v447, %v1163
        %v1165 = vpop.f32.mrb[0].mxu0
        %1166 = vmatprep.mubr.bf16.mxu0 0
        %1167 = vmatmul.mubr.bf16.gmra.mrb[0].mxu0 %v843
        %v1168 = vpop.f32.mrb[0].mxu0
        %v1169 = vadd.f32 %v447, %v1168
        %v1170 = vpop.f32.mrb[0].mxu0
        %v1171 = vpop.f32.mrb[0].mxu0
        %v1172 = vadd.f32 %v447, %v1171
        %v1173 = vpop.f32.mrb[0].mxu0
        %1174 = vmatprep.mubr.bf16.mxu0 0
        %1175 = vmatmul.mubr.bf16.gmra.mrb[0].mxu0 %v846
        %v1176 = vpop.f32.mrb[0].mxu0
        %v1177 = vadd.f32 %v447, %v1176
        %v1178 = vpop.f32.mrb[0].mxu0
        %v1179 = vpop.f32.mrb[0].mxu0
        %v1180 = vadd.f32 %v447, %v1179
        %v1181 = vpop.f32.mrb[0].mxu0
        %1182 = vmatprep.mubr.bf16.mxu0 0
        %1183 = vmatmul.mubr.bf16.gmra.mrb[0].mxu0 %v849
        %v1184 = vpop.f32.mrb[0].mxu0
        %v1185 = vadd.f32 %v447, %v1184
        %v1186 = vpop.f32.mrb[0].mxu0
        %v1187 = vpop.f32.mrb[0].mxu0
        %v1188 = vadd.f32 %v447, %v1187
        %v1189 = vpop.f32.mrb[0].mxu0
        %1190 = vmatprep.mubr.bf16.mxu0 0
        %1191 = vmatmul.mubr.bf16.gmra.mrb[0].mxu0 %v852
        %v1192 = vpop.f32.mrb[0].mxu0
        %v1193 = vadd.f32 %v447, %v1192
        %v1194 = vpop.f32.mrb[0].mxu0
        %v1195 = vpop.f32.mrb[0].mxu0
        %v1196 = vadd.f32 %v447, %v1195
        %v1197 = vpop.f32.mrb[0].mxu0
        %1198 = vmatprep.mubr.bf16.mxu0 0
        %1199 = vmatmul.mubr.bf16.gmra.mrb[0].mxu0 %v855
        %v1200 = vpop.f32.mrb[0].mxu0
        %v1201 = vadd.f32 %v447, %v1200
        %v1202 = vpop.f32.mrb[0].mxu0
        %v1203 = vpop.f32.mrb[0].mxu0
        %v1204 = vadd.f32 %v447, %v1203
        %v1205 = vpop.f32.mrb[0].mxu0
        %1206 = vmatprep.mubr.bf16.mxu0 0
        %1207 = vmatmul.mubr.bf16.gmra.mrb[0].mxu0 %v858
        %v1208 = vpop.f32.mrb[0].mxu0
        %v1209 = vadd.f32 %v447, %v1208
        %v1210 = vpop.f32.mrb[0].mxu0
        %v1211 = vpop.f32.mrb[0].mxu0
        %v1212 = vadd.f32 %v447, %v1211
        %v1213 = vpop.f32.mrb[0].mxu0
        %1214 = vmatprep.mubr.bf16.mxu0 0
        %1215 = vmatmul.mubr.bf16.gmra.mrb[0].mxu0 %v861
        %v1216 = vpop.f32.mrb[0].mxu0
        %v1217 = vadd.f32 %v447, %v1216
        %v1218 = vpop.f32.mrb[0].mxu0
        %v1219 = vpop.f32.mrb[0].mxu0
        %v1220 = vadd.f32 %v447, %v1219
        %v1221 = vpop.f32.mrb[0].mxu0
        %1222 = vmatprep.mubr.bf16.mxu0 0
        %1223 = vmatmul.mubr.bf16.gmra.mrb[0].mxu0 %v864
        %v1224 = vpop.f32.mrb[0].mxu0
        %v1225 = vadd.f32 %v447, %v1224
        %v1226 = vpop.f32.mrb[0].mxu0
        %v1227 = vpop.f32.mrb[0].mxu0
        %v1228 = vadd.f32 %v447, %v1227
        %v1229 = vpop.f32.mrb[0].mxu0
        %1230 = vmatprep.mubr.bf16.mxu0 0
        %1231 = vmatmul.mubr.bf16.gmra.mrb[0].mxu0 %v867
        %v1232 = vpop.f32.mrb[0].mxu0
        %v1233 = vadd.f32 %v447, %v1232
        %v1234 = vpop.f32.mrb[0].mxu0
        %v1235 = vpop.f32.mrb[0].mxu0
        %v1236 = vadd.f32 %v447, %v1235
        %v1237 = vpop.f32.mrb[0].mxu0
        %1238 = vmatprep.mubr.bf16.mxu0 0
        %1239 = vmatmul.mubr.bf16.gmra.mrb[0].mxu0 %v870
        %v1240 = vpop.f32.mrb[0].mxu0
        %v1241 = vadd.f32 %v447, %v1240
        %v1242 = vpop.f32.mrb[0].mxu0
        %v1243 = vpop.f32.mrb[0].mxu0
        %v1244 = vadd.f32 %v447, %v1243
        %v1245 = vpop.f32.mrb[0].mxu0
        %1246 = vmatprep.mubr.bf16.mxu0 0
        %1247 = vmatmul.mubr.bf16.gmra.mrb[0].mxu0 %v873
        %v1248 = vpop.f32.mrb[0].mxu0
        %v1249 = vadd.f32 %v447, %v1248
        %v1250 = vpop.f32.mrb[0].mxu0
        %v1251 = vpop.f32.mrb[0].mxu0
        %v1252 = vadd.f32 %v447, %v1251
        %v1253 = vpop.f32.mrb[0].mxu0
        %1254 = vmatprep.mubr.bf16.mxu0 0
        %1255 = vmatmul.mubr.bf16.gmra.mrb[0].mxu0 %v876
        %v1256 = vpop.f32.mrb[0].mxu0
        %v1257 = vadd.f32 %v447, %v1256
        %v1258 = vpop.f32.mrb[0].mxu0
        %v1259 = vpop.f32.mrb[0].mxu0
        %v1260 = vadd.f32 %v447, %v1259
        %v1261 = vpop.f32.mrb[0].mxu0
        %1262 = vmatprep.mubr.bf16.mxu0 0
        %1263 = vmatmul.mubr.bf16.gmra.mrb[0].mxu0 %v879
        %v1264 = vpop.f32.mrb[0].mxu0
        %v1265 = vadd.f32 %v447, %v1264
        %v1266 = vpop.f32.mrb[0].mxu0
        %v1267 = vpop.f32.mrb[0].mxu0
        %v1268 = vadd.f32 %v447, %v1267
        %v1269 = vpop.f32.mrb[0].mxu0
        %1270 = vmatprep.mubr.bf16.mxu0 0
        %1271 = vmatmul.mubr.bf16.gmra.mrb[0].mxu0 %v882
        %v1272 = vpop.f32.mrb[0].mxu0
        %v1273 = vadd.f32 %v447, %v1272
        %v1274 = vpop.f32.mrb[0].mxu0
        %v1275 = vpop.f32.mrb[0].mxu0
        %v1276 = vadd.f32 %v447, %v1275
        %v1277 = vpop.f32.mrb[0].mxu0
        %1278 = vmatprep.mubr.bf16.mxu0 0
        %1279 = vmatmul.mubr.bf16.gmra.mrb[0].mxu0 %v885
        %v1280 = vpop.f32.mrb[0].mxu0
        %v1281 = vadd.f32 %v447, %v1280
        %v1282 = vpop.f32.mrb[0].mxu0
        %v1283 = vpop.f32.mrb[0].mxu0
        %v1284 = vadd.f32 %v447, %v1283
        %v1285 = vpop.f32.mrb[0].mxu0
        %1286 = vmatprep.mubr.bf16.mxu0 0
        %1287 = vmatmul.mubr.bf16.gmra.mrb[0].mxu0 %v888
        %v1288 = vpop.f32.mrb[0].mxu0
        %v1289 = vadd.f32 %v447, %v1288
        %v1290 = vpop.f32.mrb[0].mxu0
        %v1291 = vpop.f32.mrb[0].mxu0
        %v1292 = vadd.f32 %v447, %v1291
        %v1293 = vpop.f32.mrb[0].mxu0
        %1294 = vmatprep.mubr.bf16.mxu0 0
        %1295 = vmatmul.mubr.bf16.gmra.mrb[0].mxu0 %v891
        %v1296 = vpop.f32.mrb[0].mxu0
        %v1297 = vadd.f32 %v447, %v1296
        %v1298 = vpop.f32.mrb[0].mxu0
        %v1299 = vpop.f32.mrb[0].mxu0
        %v1300 = vadd.f32 %v447, %v1299
        %v1301 = vpop.f32.mrb[0].mxu0
        %1302 = vmatprep.mubr.bf16.mxu0 0
        %1303 = vmatmul.mubr.bf16.gmra.mrb[0].mxu0 %v894
        %v1304 = vpop.f32.mrb[0].mxu0
        %v1305 = vadd.f32 %v447, %v1304
        %v1306 = vpop.f32.mrb[0].mxu0
        %v1307 = vpop.f32.mrb[0].mxu0
        %v1308 = vadd.f32 %v447, %v1307
        %v1309 = vpop.f32.mrb[0].mxu0
        %1310 = vmatprep.mubr.bf16.mxu0 0
        %1311 = vmatmul.mubr.bf16.gmra.mrb[0].mxu0 %v897
        %v1312 = vpop.f32.mrb[0].mxu0
        %v1313 = vadd.f32 %v447, %v1312
        %v1314 = vpop.f32.mrb[0].mxu0
        %v1315 = vpop.f32.mrb[0].mxu0
        %v1316 = vadd.f32 %v447, %v1315
        %v1317 = vpop.f32.mrb[0].mxu0
        %1318 = vmatprep.mubr.bf16.mxu0 0
        %1319 = vmatmul.mubr.bf16.gmra.mrb[0].mxu0 %v900
        %v1320 = vpop.f32.mrb[0].mxu0
        %v1321 = vadd.f32 %v447, %v1320
        %v1322 = vpop.f32.mrb[0].mxu0
        %v1323 = vpop.f32.mrb[0].mxu0
        %v1324 = vadd.f32 %v447, %v1323
        %v1325 = vpop.f32.mrb[0].mxu0
        %1326 = vmatprep.mubr.bf16.mxu0 0
        %1327 = vmatmul.mubr.bf16.gmra.mrb[0].mxu0 %v903
        %v1328 = vpop.f32.mrb[0].mxu0
        %v1329 = vadd.f32 %v447, %v1328
        %v1330 = vpop.f32.mrb[0].mxu0
        %v1331 = vpop.f32.mrb[0].mxu0
        %v1332 = vadd.f32 %v447, %v1331
        %v1333 = vpop.f32.mrb[0].mxu0
        %1334 = vmatprep.mubr.bf16.mxu0 0
        %1335 = vmatmul.mubr.bf16.gmra.mrb[0].mxu0 %v906
        %v1336 = vpop.f32.mrb[0].mxu0
        %v1337 = vadd.f32 %v447, %v1336
        %v1338 = vpop.f32.mrb[0].mxu0
        %v1339 = vpop.f32.mrb[0].mxu0
        %v1340 = vadd.f32 %v447, %v1339
        %v1341 = vpop.f32.mrb[0].mxu0
        %1342 = vmatprep.mubr.bf16.mxu0 0
        %1343 = vmatmul.mubr.bf16.gmra.mrb[0].mxu0 %v909
        %v1344 = vpop.f32.mrb[0].mxu0
        %v1345 = vadd.f32 %v447, %v1344
        %v1346 = vpop.f32.mrb[0].mxu0
        %v1347 = vpop.f32.mrb[0].mxu0
        %v1348 = vadd.f32 %v447, %v1347
        %v1349 = vpop.f32.mrb[0].mxu0
        %1350 = vmatprep.mubr.bf16.mxu0 0
        %1351 = vmatmul.mubr.bf16.gmra.mrb[0].mxu0 %v912
        %v1352 = vpop.f32.mrb[0].mxu0
        %v1353 = vadd.f32 %v447, %v1352
        %v1354 = vpop.f32.mrb[0].mxu0
        %v1355 = vpop.f32.mrb[0].mxu0
        %v1356 = vadd.f32 %v447, %v1355
        %v1357 = vpop.f32.mrb[0].mxu0
        %1358 = vmatprep.mubr.bf16.mxu0 0
        %1359 = vmatmul.mubr.bf16.gmra.mrb[0].mxu0 %v915
        %v1360 = vpop.f32.mrb[0].mxu0
        %v1361 = vadd.f32 %v447, %v1360
        %v1362 = vpop.f32.mrb[0].mxu0
        %v1363 = vpop.f32.mrb[0].mxu0
        %v1364 = vadd.f32 %v447, %v1363
        %v1365 = vpop.f32.mrb[0].mxu0
        %1366 = vmatprep.mubr.bf16.mxu0 0
        %1367 = vmatmul.mubr.bf16.gmra.mrb[0].mxu0 %v918
        %v1368 = vpop.f32.mrb[0].mxu0
        %v1369 = vadd.f32 %v447, %v1368
        %v1370 = vpop.f32.mrb[0].mxu0
        %v1371 = vpop.f32.mrb[0].mxu0
        %v1372 = vadd.f32 %v447, %v1371
        %v1373 = vpop.f32.mrb[0].mxu0
        %1374 = vmatprep.mubr.bf16.mxu0 0
        %1375 = vmatmul.mubr.bf16.gmra.mrb[0].mxu0 %v921
        %v1376 = vpop.f32.mrb[0].mxu0
        %v1377 = vadd.f32 %v447, %v1376
        %v1378 = vpop.f32.mrb[0].mxu0
        %v1379 = vpop.f32.mrb[0].mxu0
        %v1380 = vadd.f32 %v447, %v1379
        %v1381 = vpop.f32.mrb[0].mxu0
        %1382 = vmatprep.mubr.bf16.mxu0 0
        %1383 = vmatmul.mubr.bf16.gmra.mrb[0].mxu0 %v924
        %v1384 = vpop.f32.mrb[0].mxu0
        %v1385 = vadd.f32 %v447, %v1384
        %v1386 = vpop.f32.mrb[0].mxu0
        %v1387 = vpop.f32.mrb[0].mxu0
        %v1388 = vadd.f32 %v447, %v1387
        %v1389 = vpop.f32.mrb[0].mxu0
        %1390 = vmatprep.mubr.bf16.mxu0 0
        %1391 = vmatmul.mubr.bf16.gmra.mrb[0].mxu0 %v927
        %v1392 = vpop.f32.mrb[0].mxu0
        %v1393 = vadd.f32 %v447, %v1392
        %v1394 = vpop.f32.mrb[0].mxu0
        %v1395 = vpop.f32.mrb[0].mxu0
        %v1396 = vadd.f32 %v447, %v1395
        %v1397 = vpop.f32.mrb[0].mxu0
        %1398 = vmatprep.mubr.bf16.mxu0 0
        %1399 = vmatmul.mubr.bf16.gmra.mrb[0].mxu0 %v930
        %v1400 = vpop.f32.mrb[0].mxu0
        %v1401 = vadd.f32 %v447, %v1400
        %v1402 = vpop.f32.mrb[0].mxu0
        %v1403 = vpop.f32.mrb[0].mxu0
        %v1404 = vadd.f32 %v447, %v1403
        %v1405 = vpop.f32.mrb[0].mxu0
        %1406 = vmatprep.mubr.bf16.mxu0 0
        %1407 = vmatmul.mubr.bf16.gmra.mrb[0].mxu0 %v933
        %v1408 = vpop.f32.mrb[0].mxu0
        %v1409 = vadd.f32 %v447, %v1408
        %v1410 = vpop.f32.mrb[0].mxu0
        %v1411 = vpop.f32.mrb[0].mxu0
        %v1412 = vadd.f32 %v447, %v1411
        %v1413 = vpop.f32.mrb[0].mxu0
        %1414 = vmatprep.mubr.bf16.mxu0 0
        %1415 = vmatmul.mubr.bf16.gmra.mrb[0].mxu0 %v936
        %v1416 = vpop.f32.mrb[0].mxu0
        %v1417 = vadd.f32 %v447, %v1416
        %v1418 = vpop.f32.mrb[0].mxu0
        %v1419 = vpop.f32.mrb[0].mxu0
        %v1420 = vadd.f32 %v447, %v1419
        %v1421 = vpop.f32.mrb[0].mxu0
        %1422 = vmatprep.mubr.bf16.mxu0 0
        %1423 = vmatmul.mubr.bf16.gmra.mrb[0].mxu0 %v939
        %v1424 = vpop.f32.mrb[0].mxu0
        %v1425 = vadd.f32 %v447, %v1424
        %v1426 = vpop.f32.mrb[0].mxu0
        %v1427 = vpop.f32.mrb[0].mxu0
        %v1428 = vadd.f32 %v447, %v1427
        %v1429 = vpop.f32.mrb[0].mxu0
        %1430 = vmatprep.mubr.bf16.mxu0 0
        %1431 = vmatmul.mubr.bf16.gmra.mrb[0].mxu0 %v942
        %v1432 = vpop.f32.mrb[0].mxu0
        %v1433 = vadd.f32 %v447, %v1432
        %v1434 = vpop.f32.mrb[0].mxu0
        %v1435 = vpop.f32.mrb[0].mxu0
        %v1436 = vadd.f32 %v447, %v1435
        %v1437 = vpop.f32.mrb[0].mxu0
        %1438 = vmatprep.mubr.bf16.mxu0 0
        %1439 = vmatmul.mubr.bf16.gmra.mrb[0].mxu0 %v945
        %v1440 = vpop.f32.mrb[0].mxu0
        %v1441 = vadd.f32 %v447, %v1440
        %v1442 = vpop.f32.mrb[0].mxu0
        %v1443 = vpop.f32.mrb[0].mxu0
        %v1444 = vadd.f32 %v447, %v1443
        %v1445 = vpop.f32.mrb[0].mxu0
        %1446 = vmatprep.mubr.bf16.mxu0 0
        %1447 = vmatmul.mubr.bf16.gmra.mrb[0].mxu0 %v948
        %v1448 = vpop.f32.mrb[0].mxu0
        %v1449 = vadd.f32 %v447, %v1448
        %v1450 = vpop.f32.mrb[0].mxu0
        %v1451 = vpop.f32.mrb[0].mxu0
        %v1452 = vadd.f32 %v447, %v1451
        %v1453 = vpop.f32.mrb[0].mxu0
        %1454 = vmatprep.mubr.bf16.mxu0 0
        %1455 = vmatmul.mubr.bf16.gmra.mrb[0].mxu0 %v951
        %v1456 = vpop.f32.mrb[0].mxu0
        %v1457 = vadd.f32 %v447, %v1456
        %v1458 = vpop.f32.mrb[0].mxu0
        %v1459 = vpop.f32.mrb[0].mxu0
        %v1460 = vadd.f32 %v447, %v1459
        %v1461 = vpop.f32.mrb[0].mxu0
        %1462 = vmatprep.mubr.bf16.mxu0 0
        %1463 = vmatmul.mubr.bf16.gmra.mrb[0].mxu0 %v954
        %v1464 = vpop.f32.mrb[0].mxu0
        %v1465 = vadd.f32 %v447, %v1464
        %v1466 = vpop.f32.mrb[0].mxu0
        %v1467 = vpop.f32.mrb[0].mxu0
        %v1468 = vadd.f32 %v447, %v1467
        %v1469 = vpop.f32.mrb[0].mxu0
        %1470 = vmatprep.mubr.bf16.mxu0 0
        %1471 = vmatmul.mubr.bf16.gmra.mrb[0].mxu0 %v957
        %v1472 = vpop.f32.mrb[0].mxu0
        %v1473 = vadd.f32 %v447, %v1472
        %v1474 = vpop.f32.mrb[0].mxu0
        %v1475 = vpop.f32.mrb[0].mxu0
        %v1476 = vadd.f32 %v447, %v1475
        %v1477 = vpop.f32.mrb[0].mxu0
        %1478 = vmatprep.mubr.bf16.mxu0 0
        %1479 = vmatmul.mubr.bf16.gmra.mrb[0].mxu0 %v960
        %v1480 = vpop.f32.mrb[0].mxu0
        %v1481 = vadd.f32 %v447, %v1480
        %v1482 = vpop.f32.mrb[0].mxu0
        %v1483 = vpop.f32.mrb[0].mxu0
        %v1484 = vadd.f32 %v447, %v1483
        %v1485 = vpop.f32.mrb[0].mxu0
        %1486 = vmatprep.mubr.bf16.mxu0 0
        %1487 = vmatmul.mubr.bf16.gmra.mrb[0].mxu0 %v963
        %v1488 = vpop.f32.mrb[0].mxu0
        %v1489 = vadd.f32 %v447, %v1488
        %v1490 = vpop.f32.mrb[0].mxu0
        %v1491 = vpop.f32.mrb[0].mxu0
        %v1492 = vadd.f32 %v447, %v1491
        %v1493 = vpop.f32.mrb[0].mxu0
        %1494 = vmatprep.mubr.bf16.mxu0 0
        %1495 = vmatmul.mubr.bf16.gmra.mrb[0].mxu0 %v966
        %v1496 = vpop.f32.mrb[0].mxu0
        %v1497 = vadd.f32 %v447, %v1496
        %v1498 = vpop.f32.mrb[0].mxu0
        %v1499 = vpop.f32.mrb[0].mxu0
        %v1500 = vadd.f32 %v447, %v1499
        %v1501 = vpop.f32.mrb[0].mxu0
        %1502 = vmatprep.mubr.bf16.mxu0 0
        %1503 = vmatmul.mubr.bf16.gmra.mrb[0].mxu0 %v969
        %v1504 = vpop.f32.mrb[0].mxu0
        %v1505 = vadd.f32 %v447, %v1504
        %v1506 = vpop.f32.mrb[0].mxu0
        %v1507 = vpop.f32.mrb[0].mxu0
        %v1508 = vadd.f32 %v447, %v1507
        %v1509 = vpop.f32.mrb[0].mxu0
        %1510 = vmatprep.mubr.bf16.mxu0 0
        %1511 = vmatmul.mubr.bf16.gmra.mrb[0].mxu0 %v972
        %v1512 = vpop.f32.mrb[0].mxu0
        %v1513 = vadd.f32 %v447, %v1512
        %v1514 = vpop.f32.mrb[0].mxu0
        %v1515 = vpop.f32.mrb[0].mxu0
        %v1516 = vadd.f32 %v447, %v1515
        %v1517 = vpop.f32.mrb[0].mxu0
        %1518 = vdwg.mxu0
        %v1519 = vsub.f32 0.0, %v1009
        %v1520 = vsub.f32 0.0, %v1012
        %v1521 = vsub.f32 0.0, %v1017
        %v1522 = vsub.f32 0.0, %v1020
        %v1523 = vsub.f32 0.0, %v1025
        %v1524 = vsub.f32 0.0, %v1028
        %v1525 = vsub.f32 0.0, %v1033
        %v1526 = vsub.f32 0.0, %v1036
        %v1527 = vsub.f32 0.0, %v1041
        %v1528 = vsub.f32 0.0, %v1044
        %v1529 = vsub.f32 0.0, %v1049
        %v1530 = vsub.f32 0.0, %v1052
        %v1531 = vsub.f32 0.0, %v1057
        %v1532 = vsub.f32 0.0, %v1060
        %v1533 = vsub.f32 0.0, %v1065
        %v1534 = vsub.f32 0.0, %v1068
        %v1535 = vsub.f32 0.0, %v1073
        %v1536 = vsub.f32 0.0, %v1076
        %v1537 = vsub.f32 0.0, %v1081
        %v1538 = vsub.f32 0.0, %v1084
        %v1539 = vsub.f32 0.0, %v1089
        %v1540 = vsub.f32 0.0, %v1092
        %v1541 = vsub.f32 0.0, %v1097
        %v1542 = vsub.f32 0.0, %v1100
        %v1543 = vsub.f32 0.0, %v1105
        %v1544 = vsub.f32 0.0, %v1108
        %v1545 = vsub.f32 0.0, %v1113
        %v1546 = vsub.f32 0.0, %v1116
        %v1547 = vsub.f32 0.0, %v1121
        %v1548 = vsub.f32 0.0, %v1124
        %v1549 = vsub.f32 0.0, %v1129
        %v1550 = vsub.f32 0.0, %v1132
        %v1551 = vsub.f32 0.0, %v1137
        %v1552 = vsub.f32 0.0, %v1140
        %v1553 = vsub.f32 0.0, %v1145
        %v1554 = vsub.f32 0.0, %v1148
        %v1555 = vsub.f32 0.0, %v1153
        %v1556 = vsub.f32 0.0, %v1156
        %v1557 = vsub.f32 0.0, %v1161
        %v1558 = vsub.f32 0.0, %v1164
        %v1559 = vsub.f32 0.0, %v1169
        %v1560 = vsub.f32 0.0, %v1172
        %v1561 = vsub.f32 0.0, %v1177
        %v1562 = vsub.f32 0.0, %v1180
        %v1563 = vsub.f32 0.0, %v1185
        %v1564 = vsub.f32 0.0, %v1188
        %v1565 = vsub.f32 0.0, %v1193
        %v1566 = vsub.f32 0.0, %v1196
        %v1567 = vsub.f32 0.0, %v1201
        %v1568 = vsub.f32 0.0, %v1204
        %v1569 = vsub.f32 0.0, %v1209
        %v1570 = vsub.f32 0.0, %v1212
        %v1571 = vsub.f32 0.0, %v1217
        %v1572 = vsub.f32 0.0, %v1220
        %v1573 = vsub.f32 0.0, %v1225
        %v1574 = vsub.f32 0.0, %v1228
        %v1575 = vsub.f32 0.0, %v1233
        %v1576 = vsub.f32 0.0, %v1236
        %v1577 = vsub.f32 0.0, %v1241
        %v1578 = vsub.f32 0.0, %v1244
        %v1579 = vsub.f32 0.0, %v1249
        %v1580 = vsub.f32 0.0, %v1252
        %v1581 = vsub.f32 0.0, %v1257
        %v1582 = vsub.f32 0.0, %v1260
        %v1583 = vsub.f32 0.0, %v1265
        %v1584 = vsub.f32 0.0, %v1268
        %v1585 = vsub.f32 0.0, %v1273
        %v1586 = vsub.f32 0.0, %v1276
        %v1587 = vsub.f32 0.0, %v1281
        %v1588 = vsub.f32 0.0, %v1284
        %v1589 = vsub.f32 0.0, %v1289
        %v1590 = vsub.f32 0.0, %v1292
        %v1591 = vsub.f32 0.0, %v1297
        %v1592 = vsub.f32 0.0, %v1300
        %v1593 = vsub.f32 0.0, %v1305
        %v1594 = vsub.f32 0.0, %v1308
        %v1595 = vsub.f32 0.0, %v1313
        %v1596 = vsub.f32 0.0, %v1316
        %v1597 = vsub.f32 0.0, %v1321
        %v1598 = vsub.f32 0.0, %v1324
        %v1599 = vsub.f32 0.0, %v1329
        %v1600 = vsub.f32 0.0, %v1332
        %v1601 = vsub.f32 0.0, %v1337
        %v1602 = vsub.f32 0.0, %v1340
        %v1603 = vsub.f32 0.0, %v1345
        %v1604 = vsub.f32 0.0, %v1348
        %v1605 = vsub.f32 0.0, %v1353
        %v1606 = vsub.f32 0.0, %v1356
        %v1607 = vsub.f32 0.0, %v1361
        %v1608 = vsub.f32 0.0, %v1364
        %v1609 = vsub.f32 0.0, %v1369
        %v1610 = vsub.f32 0.0, %v1372
        %v1611 = vsub.f32 0.0, %v1377
        %v1612 = vsub.f32 0.0, %v1380
        %v1613 = vsub.f32 0.0, %v1385
        %v1614 = vsub.f32 0.0, %v1388
        %v1615 = vsub.f32 0.0, %v1393
        %v1616 = vsub.f32 0.0, %v1396
        %v1617 = vsub.f32 0.0, %v1401
        %v1618 = vsub.f32 0.0, %v1404
        %v1619 = vsub.f32 0.0, %v1409
        %v1620 = vsub.f32 0.0, %v1412
        %v1621 = vsub.f32 0.0, %v1417
        %v1622 = vsub.f32 0.0, %v1420
        %v1623 = vsub.f32 0.0, %v1425
        %v1624 = vsub.f32 0.0, %v1428
        %v1625 = vsub.f32 0.0, %v1433
        %v1626 = vsub.f32 0.0, %v1436
        %v1627 = vsub.f32 0.0, %v1441
        %v1628 = vsub.f32 0.0, %v1444
        %v1629 = vsub.f32 0.0, %v1449
        %v1630 = vsub.f32 0.0, %v1452
        %v1631 = vsub.f32 0.0, %v1457
        %v1632 = vsub.f32 0.0, %v1460
        %v1633 = vsub.f32 0.0, %v1465
        %v1634 = vsub.f32 0.0, %v1468
        %v1635 = vsub.f32 0.0, %v1473
        %v1636 = vsub.f32 0.0, %v1476
        %v1637 = vsub.f32 0.0, %v1481
        %v1638 = vsub.f32 0.0, %v1484
        %v1639 = vsub.f32 0.0, %v1489
        %v1640 = vsub.f32 0.0, %v1492
        %v1641 = vsub.f32 0.0, %v1497
        %v1642 = vsub.f32 0.0, %v1500
        %v1643 = vsub.f32 0.0, %v1505
        %v1644 = vsub.f32 0.0, %v1508
        %v1645 = vsub.f32 0.0, %v1513
        %v1646 = vsub.f32 0.0, %v1516
        %v1647 = vmul.f32 %v1519, 1.442695
        %v1648 = vpow.pop %v1647
        %v1649 = vmul.f32 %v1520, 1.442695
        %v1650 = vpow.pop %v1649
        %v1651 = vmul.f32 %v1521, 1.442695
        %v1652 = vpow.pop %v1651
        %v1653 = vmul.f32 %v1522, 1.442695
        %v1654 = vpow.pop %v1653
        %v1655 = vmul.f32 %v1523, 1.442695
        %v1656 = vpow.pop %v1655
        %v1657 = vmul.f32 %v1524, 1.442695
        %v1658 = vpow.pop %v1657
        %v1659 = vmul.f32 %v1525, 1.442695
        %v1660 = vpow.pop %v1659
        %v1661 = vmul.f32 %v1526, 1.442695
        %v1662 = vpow.pop %v1661
        %v1663 = vmul.f32 %v1527, 1.442695
        %v1664 = vpow.pop %v1663
        %v1665 = vmul.f32 %v1528, 1.442695
        %v1666 = vpow.pop %v1665
        %v1667 = vmul.f32 %v1529, 1.442695
        %v1668 = vpow.pop %v1667
        %v1669 = vmul.f32 %v1530, 1.442695
        %v1670 = vpow.pop %v1669
        %v1671 = vmul.f32 %v1531, 1.442695
        %v1672 = vpow.pop %v1671
        %v1673 = vmul.f32 %v1532, 1.442695
        %v1674 = vpow.pop %v1673
        %v1675 = vmul.f32 %v1533, 1.442695
        %v1676 = vpow.pop %v1675
        %v1677 = vmul.f32 %v1534, 1.442695
        %v1678 = vpow.pop %v1677
        %v1679 = vmul.f32 %v1535, 1.442695
        %v1680 = vpow.pop %v1679
        %v1681 = vmul.f32 %v1536, 1.442695
        %v1682 = vpow.pop %v1681
        %v1683 = vmul.f32 %v1537, 1.442695
        %v1684 = vpow.pop %v1683
        %v1685 = vmul.f32 %v1538, 1.442695
        %v1686 = vpow.pop %v1685
        %v1687 = vmul.f32 %v1539, 1.442695
        %v1688 = vpow.pop %v1687
        %v1689 = vmul.f32 %v1540, 1.442695
        %v1690 = vpow.pop %v1689
        %v1691 = vmul.f32 %v1541, 1.442695
        %v1692 = vpow.pop %v1691
        %v1693 = vmul.f32 %v1542, 1.442695
        %v1694 = vpow.pop %v1693
        %v1695 = vmul.f32 %v1543, 1.442695
        %v1696 = vpow.pop %v1695
        %v1697 = vmul.f32 %v1544, 1.442695
        %v1698 = vpow.pop %v1697
        %v1699 = vmul.f32 %v1545, 1.442695
        %v1700 = vpow.pop %v1699
        %v1701 = vmul.f32 %v1546, 1.442695
        %v1702 = vpow.pop %v1701
        %v1703 = vmul.f32 %v1547, 1.442695
        %v1704 = vpow.pop %v1703
        %v1705 = vmul.f32 %v1548, 1.442695
        %v1706 = vpow.pop %v1705
        %v1707 = vmul.f32 %v1549, 1.442695
        %v1708 = vpow.pop %v1707
        %v1709 = vmul.f32 %v1550, 1.442695
        %v1710 = vpow.pop %v1709
        %v1711 = vmul.f32 %v1551, 1.442695
        %v1712 = vpow.pop %v1711
        %v1713 = vmul.f32 %v1552, 1.442695
        %v1714 = vpow.pop %v1713
        %v1715 = vmul.f32 %v1553, 1.442695
        %v1716 = vpow.pop %v1715
        %v1717 = vmul.f32 %v1554, 1.442695
        %v1718 = vpow.pop %v1717
        %v1719 = vmul.f32 %v1555, 1.442695
        %v1720 = vpow.pop %v1719
        %v1721 = vmul.f32 %v1556, 1.442695
        %v1722 = vpow.pop %v1721
        %v1723 = vmul.f32 %v1557, 1.442695
        %v1724 = vpow.pop %v1723
        %v1725 = vmul.f32 %v1558, 1.442695
        %v1726 = vpow.pop %v1725
        %v1727 = vmul.f32 %v1559, 1.442695
        %v1728 = vpow.pop %v1727
        %v1729 = vmul.f32 %v1560, 1.442695
        %v1730 = vpow.pop %v1729
        %v1731 = vmul.f32 %v1561, 1.442695
        %v1732 = vpow.pop %v1731
        %v1733 = vmul.f32 %v1562, 1.442695
        %v1734 = vpow.pop %v1733
        %v1735 = vmul.f32 %v1563, 1.442695
        %v1736 = vpow.pop %v1735
        %v1737 = vmul.f32 %v1564, 1.442695
        %v1738 = vpow.pop %v1737
        %v1739 = vmul.f32 %v1565, 1.442695
        %v1740 = vpow.pop %v1739
        %v1741 = vmul.f32 %v1566, 1.442695
        %v1742 = vpow.pop %v1741
        %v1743 = vmul.f32 %v1567, 1.442695
        %v1744 = vpow.pop %v1743
        %v1745 = vmul.f32 %v1568, 1.442695
        %v1746 = vpow.pop %v1745
        %v1747 = vmul.f32 %v1569, 1.442695
        %v1748 = vpow.pop %v1747
        %v1749 = vmul.f32 %v1570, 1.442695
        %v1750 = vpow.pop %v1749
        %v1751 = vmul.f32 %v1571, 1.442695
        %v1752 = vpow.pop %v1751
        %v1753 = vmul.f32 %v1572, 1.442695
        %v1754 = vpow.pop %v1753
        %v1755 = vmul.f32 %v1573, 1.442695
        %v1756 = vpow.pop %v1755
        %v1757 = vmul.f32 %v1574, 1.442695
        %v1758 = vpow.pop %v1757
        %v1759 = vmul.f32 %v1575, 1.442695
        %v1760 = vpow.pop %v1759
        %v1761 = vmul.f32 %v1576, 1.442695
        %v1762 = vpow.pop %v1761
        %v1763 = vmul.f32 %v1577, 1.442695
        %v1764 = vpow.pop %v1763
        %v1765 = vmul.f32 %v1578, 1.442695
        %v1766 = vpow.pop %v1765
        %v1767 = vmul.f32 %v1579, 1.442695
        %v1768 = vpow.pop %v1767
        %v1769 = vmul.f32 %v1580, 1.442695
        %v1770 = vpow.pop %v1769
        %v1771 = vmul.f32 %v1581, 1.442695
        %v1772 = vpow.pop %v1771
        %v1773 = vmul.f32 %v1582, 1.442695
        %v1774 = vpow.pop %v1773
        %v1775 = vmul.f32 %v1583, 1.442695
        %v1776 = vpow.pop %v1775
        %v1777 = vmul.f32 %v1584, 1.442695
        %v1778 = vpow.pop %v1777
        %v1779 = vmul.f32 %v1585, 1.442695
        %v1780 = vpow.pop %v1779
        %v1781 = vmul.f32 %v1586, 1.442695
        %v1782 = vpow.pop %v1781
        %v1783 = vmul.f32 %v1587, 1.442695
        %v1784 = vpow.pop %v1783
        %v1785 = vmul.f32 %v1588, 1.442695
        %v1786 = vpow.pop %v1785
        %v1787 = vmul.f32 %v1589, 1.442695
        %v1788 = vpow.pop %v1787
        %v1789 = vmul.f32 %v1590, 1.442695
        %v1790 = vpow.pop %v1789
        %v1791 = vmul.f32 %v1591, 1.442695
        %v1792 = vpow.pop %v1791
        %v1793 = vmul.f32 %v1592, 1.442695
        %v1794 = vpow.pop %v1793
        %v1795 = vmul.f32 %v1593, 1.442695
        %v1796 = vpow.pop %v1795
        %v1797 = vmul.f32 %v1594, 1.442695
        %v1798 = vpow.pop %v1797
        %v1799 = vmul.f32 %v1595, 1.442695
        %v1800 = vpow.pop %v1799
        %v1801 = vmul.f32 %v1596, 1.442695
        %v1802 = vpow.pop %v1801
        %v1803 = vmul.f32 %v1597, 1.442695
        %v1804 = vpow.pop %v1803
        %v1805 = vmul.f32 %v1598, 1.442695
        %v1806 = vpow.pop %v1805
        %v1807 = vmul.f32 %v1599, 1.442695
        %v1808 = vpow.pop %v1807
        %v1809 = vmul.f32 %v1600, 1.442695
        %v1810 = vpow.pop %v1809
        %v1811 = vmul.f32 %v1601, 1.442695
        %v1812 = vpow.pop %v1811
        %v1813 = vmul.f32 %v1602, 1.442695
        %v1814 = vpow.pop %v1813
        %v1815 = vmul.f32 %v1603, 1.442695
        %v1816 = vpow.pop %v1815
        %v1817 = vmul.f32 %v1604, 1.442695
        %v1818 = vpow.pop %v1817
        %v1819 = vmul.f32 %v1605, 1.442695
        %v1820 = vpow.pop %v1819
        %v1821 = vmul.f32 %v1606, 1.442695
        %v1822 = vpow.pop %v1821
        %v1823 = vmul.f32 %v1607, 1.442695
        %v1824 = vpow.pop %v1823
        %v1825 = vmul.f32 %v1608, 1.442695
        %v1826 = vpow.pop %v1825
        %v1827 = vmul.f32 %v1609, 1.442695
        %v1828 = vpow.pop %v1827
        %v1829 = vmul.f32 %v1610, 1.442695
        %v1830 = vpow.pop %v1829
        %v1831 = vmul.f32 %v1611, 1.442695
        %v1832 = vpow.pop %v1831
        %v1833 = vmul.f32 %v1612, 1.442695
        %v1834 = vpow.pop %v1833
        %v1835 = vmul.f32 %v1613, 1.442695
        %v1836 = vpow.pop %v1835
        %v1837 = vmul.f32 %v1614, 1.442695
        %v1838 = vpow.pop %v1837
        %v1839 = vmul.f32 %v1615, 1.442695
        %v1840 = vpow.pop %v1839
        %v1841 = vmul.f32 %v1616, 1.442695
        %v1842 = vpow.pop %v1841
        %v1843 = vmul.f32 %v1617, 1.442695
        %v1844 = vpow.pop %v1843
        %v1845 = vmul.f32 %v1618, 1.442695
        %v1846 = vpow.pop %v1845
        %v1847 = vmul.f32 %v1619, 1.442695
        %v1848 = vpow.pop %v1847
        %v1849 = vmul.f32 %v1620, 1.442695
        %v1850 = vpow.pop %v1849
        %v1851 = vmul.f32 %v1621, 1.442695
        %v1852 = vpow.pop %v1851
        %v1853 = vmul.f32 %v1622, 1.442695
        %v1854 = vpow.pop %v1853
        %v1855 = vmul.f32 %v1623, 1.442695
        %v1856 = vpow.pop %v1855
        %v1857 = vmul.f32 %v1624, 1.442695
        %v1858 = vpow.pop %v1857
        %v1859 = vmul.f32 %v1625, 1.442695
        %v1860 = vpow.pop %v1859
        %v1861 = vmul.f32 %v1626, 1.442695
        %v1862 = vpow.pop %v1861
        %v1863 = vmul.f32 %v1627, 1.442695
        %v1864 = vpow.pop %v1863
        %v1865 = vmul.f32 %v1628, 1.442695
        %v1866 = vpow.pop %v1865
        %v1867 = vmul.f32 %v1629, 1.442695
        %v1868 = vpow.pop %v1867
        %v1869 = vmul.f32 %v1630, 1.442695
        %v1870 = vpow.pop %v1869
        %v1871 = vmul.f32 %v1631, 1.442695
        %v1872 = vpow.pop %v1871
        %v1873 = vmul.f32 %v1632, 1.442695
        %v1874 = vpow.pop %v1873
        %v1875 = vmul.f32 %v1633, 1.442695
        %v1876 = vpow.pop %v1875
        %v1877 = vmul.f32 %v1634, 1.442695
        %v1878 = vpow.pop %v1877
        %v1879 = vmul.f32 %v1635, 1.442695
        %v1880 = vpow.pop %v1879
        %v1881 = vmul.f32 %v1636, 1.442695
        %v1882 = vpow.pop %v1881
        %v1883 = vmul.f32 %v1637, 1.442695
        %v1884 = vpow.pop %v1883
        %v1885 = vmul.f32 %v1638, 1.442695
        %v1886 = vpow.pop %v1885
        %v1887 = vmul.f32 %v1639, 1.442695
        %v1888 = vpow.pop %v1887
        %v1889 = vmul.f32 %v1640, 1.442695
        %v1890 = vpow.pop %v1889
        %v1891 = vmul.f32 %v1641, 1.442695
        %v1892 = vpow.pop %v1891
        %v1893 = vmul.f32 %v1642, 1.442695
        %v1894 = vpow.pop %v1893
        %v1895 = vmul.f32 %v1643, 1.442695
        %v1896 = vpow.pop %v1895
        %v1897 = vmul.f32 %v1644, 1.442695
        %v1898 = vpow.pop %v1897
        %v1899 = vmul.f32 %v1645, 1.442695
        %v1900 = vpow.pop %v1899
        %v1901 = vmul.f32 %v1646, 1.442695
        %v1902 = vpow.pop %v1901
        %v1903 = vadd.f32 %v1648, 1.0
        %v1904 = vadd.f32 %v1650, 1.0
        %v1905 = vadd.f32 %v1652, 1.0
        %v1906 = vadd.f32 %v1654, 1.0
        %v1907 = vadd.f32 %v1656, 1.0
        %v1908 = vadd.f32 %v1658, 1.0
        %v1909 = vadd.f32 %v1660, 1.0
        %v1910 = vadd.f32 %v1662, 1.0
        %v1911 = vadd.f32 %v1664, 1.0
        %v1912 = vadd.f32 %v1666, 1.0
        %v1913 = vadd.f32 %v1668, 1.0
        %v1914 = vadd.f32 %v1670, 1.0
        %v1915 = vadd.f32 %v1672, 1.0
        %v1916 = vadd.f32 %v1674, 1.0
        %v1917 = vadd.f32 %v1676, 1.0
        %v1918 = vadd.f32 %v1678, 1.0
        %v1919 = vadd.f32 %v1680, 1.0
        %v1920 = vadd.f32 %v1682, 1.0
        %v1921 = vadd.f32 %v1684, 1.0
        %v1922 = vadd.f32 %v1686, 1.0
        %v1923 = vadd.f32 %v1688, 1.0
        %v1924 = vadd.f32 %v1690, 1.0
        %v1925 = vadd.f32 %v1692, 1.0
        %v1926 = vadd.f32 %v1694, 1.0
        %v1927 = vadd.f32 %v1696, 1.0
        %v1928 = vadd.f32 %v1698, 1.0
        %v1929 = vadd.f32 %v1700, 1.0
        %v1930 = vadd.f32 %v1702, 1.0
        %v1931 = vadd.f32 %v1704, 1.0
        %v1932 = vadd.f32 %v1706, 1.0
        %v1933 = vadd.f32 %v1708, 1.0
        %v1934 = vadd.f32 %v1710, 1.0
        %v1935 = vadd.f32 %v1712, 1.0
        %v1936 = vadd.f32 %v1714, 1.0
        %v1937 = vadd.f32 %v1716, 1.0
        %v1938 = vadd.f32 %v1718, 1.0
        %v1939 = vadd.f32 %v1720, 1.0
        %v1940 = vadd.f32 %v1722, 1.0
        %v1941 = vadd.f32 %v1724, 1.0
        %v1942 = vadd.f32 %v1726, 1.0
        %v1943 = vadd.f32 %v1728, 1.0
        %v1944 = vadd.f32 %v1730, 1.0
        %v1945 = vadd.f32 %v1732, 1.0
        %v1946 = vadd.f32 %v1734, 1.0
        %v1947 = vadd.f32 %v1736, 1.0
        %v1948 = vadd.f32 %v1738, 1.0
        %v1949 = vadd.f32 %v1740, 1.0
        %v1950 = vadd.f32 %v1742, 1.0
        %v1951 = vadd.f32 %v1744, 1.0
        %v1952 = vadd.f32 %v1746, 1.0
        %v1953 = vadd.f32 %v1748, 1.0
        %v1954 = vadd.f32 %v1750, 1.0
        %v1955 = vadd.f32 %v1752, 1.0
        %v1956 = vadd.f32 %v1754, 1.0
        %v1957 = vadd.f32 %v1756, 1.0
        %v1958 = vadd.f32 %v1758, 1.0
        %v1959 = vadd.f32 %v1760, 1.0
        %v1960 = vadd.f32 %v1762, 1.0
        %v1961 = vadd.f32 %v1764, 1.0
        %v1962 = vadd.f32 %v1766, 1.0
        %v1963 = vadd.f32 %v1768, 1.0
        %v1964 = vadd.f32 %v1770, 1.0
        %v1965 = vadd.f32 %v1772, 1.0
        %v1966 = vadd.f32 %v1774, 1.0
        %v1967 = vadd.f32 %v1776, 1.0
        %v1968 = vadd.f32 %v1778, 1.0
        %v1969 = vadd.f32 %v1780, 1.0
        %v1970 = vadd.f32 %v1782, 1.0
        %v1971 = vadd.f32 %v1784, 1.0
        %v1972 = vadd.f32 %v1786, 1.0
        %v1973 = vadd.f32 %v1788, 1.0
        %v1974 = vadd.f32 %v1790, 1.0
        %v1975 = vadd.f32 %v1792, 1.0
        %v1976 = vadd.f32 %v1794, 1.0
        %v1977 = vadd.f32 %v1796, 1.0
        %v1978 = vadd.f32 %v1798, 1.0
        %v1979 = vadd.f32 %v1800, 1.0
        %v1980 = vadd.f32 %v1802, 1.0
        %v1981 = vadd.f32 %v1804, 1.0
        %v1982 = vadd.f32 %v1806, 1.0
        %v1983 = vadd.f32 %v1808, 1.0
        %v1984 = vadd.f32 %v1810, 1.0
        %v1985 = vadd.f32 %v1812, 1.0
        %v1986 = vadd.f32 %v1814, 1.0
        %v1987 = vadd.f32 %v1816, 1.0
        %v1988 = vadd.f32 %v1818, 1.0
        %v1989 = vadd.f32 %v1820, 1.0
        %v1990 = vadd.f32 %v1822, 1.0
        %v1991 = vadd.f32 %v1824, 1.0
        %v1992 = vadd.f32 %v1826, 1.0
        %v1993 = vadd.f32 %v1828, 1.0
        %v1994 = vadd.f32 %v1830, 1.0
        %v1995 = vadd.f32 %v1832, 1.0
        %v1996 = vadd.f32 %v1834, 1.0
        %v1997 = vadd.f32 %v1836, 1.0
        %v1998 = vadd.f32 %v1838, 1.0
        %v1999 = vadd.f32 %v1840, 1.0
        %v2000 = vadd.f32 %v1842, 1.0
        %v2001 = vadd.f32 %v1844, 1.0
        %v2002 = vadd.f32 %v1846, 1.0
        %v2003 = vadd.f32 %v1848, 1.0
        %v2004 = vadd.f32 %v1850, 1.0
        %v2005 = vadd.f32 %v1852, 1.0
        %v2006 = vadd.f32 %v1854, 1.0
        %v2007 = vadd.f32 %v1856, 1.0
        %v2008 = vadd.f32 %v1858, 1.0
        %v2009 = vadd.f32 %v1860, 1.0
        %v2010 = vadd.f32 %v1862, 1.0
        %v2011 = vadd.f32 %v1864, 1.0
        %v2012 = vadd.f32 %v1866, 1.0
        %v2013 = vadd.f32 %v1868, 1.0
        %v2014 = vadd.f32 %v1870, 1.0
        %v2015 = vadd.f32 %v1872, 1.0
        %v2016 = vadd.f32 %v1874, 1.0
        %v2017 = vadd.f32 %v1876, 1.0
        %v2018 = vadd.f32 %v1878, 1.0
        %v2019 = vadd.f32 %v1880, 1.0
        %v2020 = vadd.f32 %v1882, 1.0
        %v2021 = vadd.f32 %v1884, 1.0
        %v2022 = vadd.f32 %v1886, 1.0
        %v2023 = vadd.f32 %v1888, 1.0
        %v2024 = vadd.f32 %v1890, 1.0
        %v2025 = vadd.f32 %v1892, 1.0
        %v2026 = vadd.f32 %v1894, 1.0
        %v2027 = vadd.f32 %v1896, 1.0
        %v2028 = vadd.f32 %v1898, 1.0
        %v2029 = vadd.f32 %v1900, 1.0
        %v2030 = vadd.f32 %v1902, 1.0
        %v2031 = vrcp.pop %v1903
        %v2032 = vrcp.pop %v1904
        %v2033 = vrcp.pop %v1905
        %v2034 = vrcp.pop %v1906
        %v2035 = vrcp.pop %v1907
        %v2036 = vrcp.pop %v1908
        %v2037 = vrcp.pop %v1909
        %v2038 = vrcp.pop %v1910
        %v2039 = vrcp.pop %v1911
        %v2040 = vrcp.pop %v1912
        %v2041 = vrcp.pop %v1913
        %v2042 = vrcp.pop %v1914
        %v2043 = vrcp.pop %v1915
        %v2044 = vrcp.pop %v1916
        %v2045 = vrcp.pop %v1917
        %v2046 = vrcp.pop %v1918
        %v2047 = vrcp.pop %v1919
        %v2048 = vrcp.pop %v1920
        %v2049 = vrcp.pop %v1921
        %v2050 = vrcp.pop %v1922
        %v2051 = vrcp.pop %v1923
        %v2052 = vrcp.pop %v1924
        %v2053 = vrcp.pop %v1925
        %v2054 = vrcp.pop %v1926
        %v2055 = vrcp.pop %v1927
        %v2056 = vrcp.pop %v1928
        %v2057 = vrcp.pop %v1929
        %v2058 = vrcp.pop %v1930
        %v2059 = vrcp.pop %v1931
        %v2060 = vrcp.pop %v1932
        %v2061 = vrcp.pop %v1933
        %v2062 = vrcp.pop %v1934
        %v2063 = vrcp.pop %v1935
        %v2064 = vrcp.pop %v1936
        %v2065 = vrcp.pop %v1937
        %v2066 = vrcp.pop %v1938
        %v2067 = vrcp.pop %v1939
        %v2068 = vrcp.pop %v1940
        %v2069 = vrcp.pop %v1941
        %v2070 = vrcp.pop %v1942
        %v2071 = vrcp.pop %v1943
        %v2072 = vrcp.pop %v1944
        %v2073 = vrcp.pop %v1945
        %v2074 = vrcp.pop %v1946
        %v2075 = vrcp.pop %v1947
        %v2076 = vrcp.pop %v1948
        %v2077 = vrcp.pop %v1949
        %v2078 = vrcp.pop %v1950
        %v2079 = vrcp.pop %v1951
        %v2080 = vrcp.pop %v1952
        %v2081 = vrcp.pop %v1953
        %v2082 = vrcp.pop %v1954
        %v2083 = vrcp.pop %v1955
        %v2084 = vrcp.pop %v1956
        %v2085 = vrcp.pop %v1957
        %v2086 = vrcp.pop %v1958
        %v2087 = vrcp.pop %v1959
        %v2088 = vrcp.pop %v1960
        %v2089 = vrcp.pop %v1961
        %v2090 = vrcp.pop %v1962
        %v2091 = vrcp.pop %v1963
        %v2092 = vrcp.pop %v1964
        %v2093 = vrcp.pop %v1965
        %v2094 = vrcp.pop %v1966
        %v2095 = vrcp.pop %v1967
        %v2096 = vrcp.pop %v1968
        %v2097 = vrcp.pop %v1969
        %v2098 = vrcp.pop %v1970
        %v2099 = vrcp.pop %v1971
        %v2100 = vrcp.pop %v1972
        %v2101 = vrcp.pop %v1973
        %v2102 = vrcp.pop %v1974
        %v2103 = vrcp.pop %v1975
        %v2104 = vrcp.pop %v1976
        %v2105 = vrcp.pop %v1977
        %v2106 = vrcp.pop %v1978
        %v2107 = vrcp.pop %v1979
        %v2108 = vrcp.pop %v1980
        %v2109 = vrcp.pop %v1981
        %v2110 = vrcp.pop %v1982
        %v2111 = vrcp.pop %v1983
        %v2112 = vrcp.pop %v1984
        %v2113 = vrcp.pop %v1985
        %v2114 = vrcp.pop %v1986
        %v2115 = vrcp.pop %v1987
        %v2116 = vrcp.pop %v1988
        %v2117 = vrcp.pop %v1989
        %v2118 = vrcp.pop %v1990
        %v2119 = vrcp.pop %v1991
        %v2120 = vrcp.pop %v1992
        %v2121 = vrcp.pop %v1993
        %v2122 = vrcp.pop %v1994
        %v2123 = vrcp.pop %v1995
        %v2124 = vrcp.pop %v1996
        %v2125 = vrcp.pop %v1997
        %v2126 = vrcp.pop %v1998
        %v2127 = vrcp.pop %v1999
        %v2128 = vrcp.pop %v2000
        %v2129 = vrcp.pop %v2001
        %v2130 = vrcp.pop %v2002
        %v2131 = vrcp.pop %v2003
        %v2132 = vrcp.pop %v2004
        %v2133 = vrcp.pop %v2005
        %v2134 = vrcp.pop %v2006
        %v2135 = vrcp.pop %v2007
        %v2136 = vrcp.pop %v2008
        %v2137 = vrcp.pop %v2009
        %v2138 = vrcp.pop %v2010
        %v2139 = vrcp.pop %v2011
        %v2140 = vrcp.pop %v2012
        %v2141 = vrcp.pop %v2013
        %v2142 = vrcp.pop %v2014
        %v2143 = vrcp.pop %v2015
        %v2144 = vrcp.pop %v2016
        %v2145 = vrcp.pop %v2017
        %v2146 = vrcp.pop %v2018
        %v2147 = vrcp.pop %v2019
        %v2148 = vrcp.pop %v2020
        %v2149 = vrcp.pop %v2021
        %v2150 = vrcp.pop %v2022
        %v2151 = vrcp.pop %v2023
        %v2152 = vrcp.pop %v2024
        %v2153 = vrcp.pop %v2025
        %v2154 = vrcp.pop %v2026
        %v2155 = vrcp.pop %v2027
        %v2156 = vrcp.pop %v2028
        %v2157 = vrcp.pop %v2029
        %v2158 = vrcp.pop %v2030
        %v2159 = vmul.f32 %v1009, %v2031
        %v2160 = vmul.f32 %v1012, %v2032
        %v2161 = vmul.f32 %v1017, %v2033
        %v2162 = vmul.f32 %v1020, %v2034
        %v2163 = vmul.f32 %v1025, %v2035
        %v2164 = vmul.f32 %v1028, %v2036
        %v2165 = vmul.f32 %v1033, %v2037
        %v2166 = vmul.f32 %v1036, %v2038
        %v2167 = vmul.f32 %v1041, %v2039
        %v2168 = vmul.f32 %v1044, %v2040
        %v2169 = vmul.f32 %v1049, %v2041
        %v2170 = vmul.f32 %v1052, %v2042
        %v2171 = vmul.f32 %v1057, %v2043
        %v2172 = vmul.f32 %v1060, %v2044
        %v2173 = vmul.f32 %v1065, %v2045
        %v2174 = vmul.f32 %v1068, %v2046
        %v2175 = vmul.f32 %v1073, %v2047
        %v2176 = vmul.f32 %v1076, %v2048
        %v2177 = vmul.f32 %v1081, %v2049
        %v2178 = vmul.f32 %v1084, %v2050
        %v2179 = vmul.f32 %v1089, %v2051
        %v2180 = vmul.f32 %v1092, %v2052
        %v2181 = vmul.f32 %v1097, %v2053
        %v2182 = vmul.f32 %v1100, %v2054
        %v2183 = vmul.f32 %v1105, %v2055
        %v2184 = vmul.f32 %v1108, %v2056
        %v2185 = vmul.f32 %v1113, %v2057
        %v2186 = vmul.f32 %v1116, %v2058
        %v2187 = vmul.f32 %v1121, %v2059
        %v2188 = vmul.f32 %v1124, %v2060
        %v2189 = vmul.f32 %v1129, %v2061
        %v2190 = vmul.f32 %v1132, %v2062
        %v2191 = vmul.f32 %v1137, %v2063
        %v2192 = vmul.f32 %v1140, %v2064
        %v2193 = vmul.f32 %v1145, %v2065
        %v2194 = vmul.f32 %v1148, %v2066
        %v2195 = vmul.f32 %v1153, %v2067
        %v2196 = vmul.f32 %v1156, %v2068
        %v2197 = vmul.f32 %v1161, %v2069
        %v2198 = vmul.f32 %v1164, %v2070
        %v2199 = vmul.f32 %v1169, %v2071
        %v2200 = vmul.f32 %v1172, %v2072
        %v2201 = vmul.f32 %v1177, %v2073
        %v2202 = vmul.f32 %v1180, %v2074
        %v2203 = vmul.f32 %v1185, %v2075
        %v2204 = vmul.f32 %v1188, %v2076
        %v2205 = vmul.f32 %v1193, %v2077
        %v2206 = vmul.f32 %v1196, %v2078
        %v2207 = vmul.f32 %v1201, %v2079
        %v2208 = vmul.f32 %v1204, %v2080
        %v2209 = vmul.f32 %v1209, %v2081
        %v2210 = vmul.f32 %v1212, %v2082
        %v2211 = vmul.f32 %v1217, %v2083
        %v2212 = vmul.f32 %v1220, %v2084
        %v2213 = vmul.f32 %v1225, %v2085
        %v2214 = vmul.f32 %v1228, %v2086
        %v2215 = vmul.f32 %v1233, %v2087
        %v2216 = vmul.f32 %v1236, %v2088
        %v2217 = vmul.f32 %v1241, %v2089
        %v2218 = vmul.f32 %v1244, %v2090
        %v2219 = vmul.f32 %v1249, %v2091
        %v2220 = vmul.f32 %v1252, %v2092
        %v2221 = vmul.f32 %v1257, %v2093
        %v2222 = vmul.f32 %v1260, %v2094
        %v2223 = vmul.f32 %v1265, %v2095
        %v2224 = vmul.f32 %v1268, %v2096
        %v2225 = vmul.f32 %v1273, %v2097
        %v2226 = vmul.f32 %v1276, %v2098
        %v2227 = vmul.f32 %v1281, %v2099
        %v2228 = vmul.f32 %v1284, %v2100
        %v2229 = vmul.f32 %v1289, %v2101
        %v2230 = vmul.f32 %v1292, %v2102
        %v2231 = vmul.f32 %v1297, %v2103
        %v2232 = vmul.f32 %v1300, %v2104
        %v2233 = vmul.f32 %v1305, %v2105
        %v2234 = vmul.f32 %v1308, %v2106
        %v2235 = vmul.f32 %v1313, %v2107
        %v2236 = vmul.f32 %v1316, %v2108
        %v2237 = vmul.f32 %v1321, %v2109
        %v2238 = vmul.f32 %v1324, %v2110
        %v2239 = vmul.f32 %v1329, %v2111
        %v2240 = vmul.f32 %v1332, %v2112
        %v2241 = vmul.f32 %v1337, %v2113
        %v2242 = vmul.f32 %v1340, %v2114
        %v2243 = vmul.f32 %v1345, %v2115
        %v2244 = vmul.f32 %v1348, %v2116
        %v2245 = vmul.f32 %v1353, %v2117
        %v2246 = vmul.f32 %v1356, %v2118
        %v2247 = vmul.f32 %v1361, %v2119
        %v2248 = vmul.f32 %v1364, %v2120
        %v2249 = vmul.f32 %v1369, %v2121
        %v2250 = vmul.f32 %v1372, %v2122
        %v2251 = vmul.f32 %v1377, %v2123
        %v2252 = vmul.f32 %v1380, %v2124
        %v2253 = vmul.f32 %v1385, %v2125
        %v2254 = vmul.f32 %v1388, %v2126
        %v2255 = vmul.f32 %v1393, %v2127
        %v2256 = vmul.f32 %v1396, %v2128
        %v2257 = vmul.f32 %v1401, %v2129
        %v2258 = vmul.f32 %v1404, %v2130
        %v2259 = vmul.f32 %v1409, %v2131
        %v2260 = vmul.f32 %v1412, %v2132
        %v2261 = vmul.f32 %v1417, %v2133
        %v2262 = vmul.f32 %v1420, %v2134
        %v2263 = vmul.f32 %v1425, %v2135
        %v2264 = vmul.f32 %v1428, %v2136
        %v2265 = vmul.f32 %v1433, %v2137
        %v2266 = vmul.f32 %v1436, %v2138
        %v2267 = vmul.f32 %v1441, %v2139
        %v2268 = vmul.f32 %v1444, %v2140
        %v2269 = vmul.f32 %v1449, %v2141
        %v2270 = vmul.f32 %v1452, %v2142
        %v2271 = vmul.f32 %v1457, %v2143
        %v2272 = vmul.f32 %v1460, %v2144
        %v2273 = vmul.f32 %v1465, %v2145
        %v2274 = vmul.f32 %v1468, %v2146
        %v2275 = vmul.f32 %v1473, %v2147
        %v2276 = vmul.f32 %v1476, %v2148
        %v2277 = vmul.f32 %v1481, %v2149
        %v2278 = vmul.f32 %v1484, %v2150
        %v2279 = vmul.f32 %v1489, %v2151
        %v2280 = vmul.f32 %v1492, %v2152
        %v2281 = vmul.f32 %v1497, %v2153
        %v2282 = vmul.f32 %v1500, %v2154
        %v2283 = vmul.f32 %v1505, %v2155
        %v2284 = vmul.f32 %v1508, %v2156
        %v2285 = vmul.f32 %v1513, %v2157
        %v2286 = vmul.f32 %v1516, %v2158
        %v2287 = vld [vmem:[#allocation2] sm:$0xff]
        %v2288 = vadd.f32 %v2159, %v2160
        %v2289 = vadd.f32 %v2288, %v2161
        %v2290 = vadd.f32 %v2289, %v2162
        %v2291 = vadd.f32 %v2290, %v2163
        %v2292 = vadd.f32 %v2291, %v2164
        %v2293 = vadd.f32 %v2292, %v2165
        %v2294 = vadd.f32 %v2293, %v2166
        %v2295 = vadd.f32 %v2294, %v2167
        %v2296 = vadd.f32 %v2295, %v2168
        %v2297 = vadd.f32 %v2296, %v2169
        %v2298 = vadd.f32 %v2297, %v2170
        %v2299 = vadd.f32 %v2298, %v2171
        %v2300 = vadd.f32 %v2299, %v2172
        %v2301 = vadd.f32 %v2300, %v2173
        %v2302 = vadd.f32 %v2301, %v2174
        %v2303 = vadd.f32 %v2302, %v2175
        %v2304 = vadd.f32 %v2303, %v2176
        %v2305 = vadd.f32 %v2304, %v2177
        %v2306 = vadd.f32 %v2305, %v2178
        %v2307 = vadd.f32 %v2306, %v2179
        %v2308 = vadd.f32 %v2307, %v2180
        %v2309 = vadd.f32 %v2308, %v2181
        %v2310 = vadd.f32 %v2309, %v2182
        %v2311 = vadd.f32 %v2310, %v2183
        %v2312 = vadd.f32 %v2311, %v2184
        %v2313 = vadd.f32 %v2312, %v2185
        %v2314 = vadd.f32 %v2313, %v2186
        %v2315 = vadd.f32 %v2314, %v2187
        %v2316 = vadd.f32 %v2315, %v2188
        %v2317 = vadd.f32 %v2316, %v2189
        %v2318 = vadd.f32 %v2317, %v2190
        %v2319 = vadd.f32 %v2318, %v2191
        %v2320 = vadd.f32 %v2319, %v2192
        %v2321 = vadd.f32 %v2320, %v2193
        %v2322 = vadd.f32 %v2321, %v2194
        %v2323 = vadd.f32 %v2322, %v2195
        %v2324 = vadd.f32 %v2323, %v2196
        %v2325 = vadd.f32 %v2324, %v2197
        %v2326 = vadd.f32 %v2325, %v2198
        %v2327 = vadd.f32 %v2326, %v2199
        %v2328 = vadd.f32 %v2327, %v2200
        %v2329 = vadd.f32 %v2328, %v2201
        %v2330 = vadd.f32 %v2329, %v2202
        %v2331 = vadd.f32 %v2330, %v2203
        %v2332 = vadd.f32 %v2331, %v2204
        %v2333 = vadd.f32 %v2332, %v2205
        %v2334 = vadd.f32 %v2333, %v2206
        %v2335 = vadd.f32 %v2334, %v2207
        %v2336 = vadd.f32 %v2335, %v2208
        %v2337 = vadd.f32 %v2336, %v2209
        %v2338 = vadd.f32 %v2337, %v2210
        %v2339 = vadd.f32 %v2338, %v2211
        %v2340 = vadd.f32 %v2339, %v2212
        %v2341 = vadd.f32 %v2340, %v2213
        %v2342 = vadd.f32 %v2341, %v2214
        %v2343 = vadd.f32 %v2342, %v2215
        %v2344 = vadd.f32 %v2343, %v2216
        %v2345 = vadd.f32 %v2344, %v2217
        %v2346 = vadd.f32 %v2345, %v2218
        %v2347 = vadd.f32 %v2346, %v2219
        %v2348 = vadd.f32 %v2347, %v2220
        %v2349 = vadd.f32 %v2348, %v2221
        %v2350 = vadd.f32 %v2349, %v2222
        %v2351 = vadd.f32 %v2350, %v2223
        %v2352 = vadd.f32 %v2351, %v2224
        %v2353 = vadd.f32 %v2352, %v2225
        %v2354 = vadd.f32 %v2353, %v2226
        %v2355 = vadd.f32 %v2354, %v2227
        %v2356 = vadd.f32 %v2355, %v2228
        %v2357 = vadd.f32 %v2356, %v2229
        %v2358 = vadd.f32 %v2357, %v2230
        %v2359 = vadd.f32 %v2358, %v2231
        %v2360 = vadd.f32 %v2359, %v2232
        %v2361 = vadd.f32 %v2360, %v2233
        %v2362 = vadd.f32 %v2361, %v2234
        %v2363 = vadd.f32 %v2362, %v2235
        %v2364 = vadd.f32 %v2363, %v2236
        %v2365 = vadd.f32 %v2364, %v2237
        %v2366 = vadd.f32 %v2365, %v2238
        %v2367 = vadd.f32 %v2366, %v2239
        %v2368 = vadd.f32 %v2367, %v2240
        %v2369 = vadd.f32 %v2368, %v2241
        %v2370 = vadd.f32 %v2369, %v2242
        %v2371 = vadd.f32 %v2370, %v2243
        %v2372 = vadd.f32 %v2371, %v2244
        %v2373 = vadd.f32 %v2372, %v2245
        %v2374 = vadd.f32 %v2373, %v2246
        %v2375 = vadd.f32 %v2374, %v2247
        %v2376 = vadd.f32 %v2375, %v2248
        %v2377 = vadd.f32 %v2376, %v2249
        %v2378 = vadd.f32 %v2377, %v2250
        %v2379 = vadd.f32 %v2378, %v2251
        %v2380 = vadd.f32 %v2379, %v2252
        %v2381 = vadd.f32 %v2380, %v2253
        %v2382 = vadd.f32 %v2381, %v2254
        %v2383 = vadd.f32 %v2382, %v2255
        %v2384 = vadd.f32 %v2383, %v2256
        %v2385 = vadd.f32 %v2384, %v2257
        %v2386 = vadd.f32 %v2385, %v2258
        %v2387 = vadd.f32 %v2386, %v2259
        %v2388 = vadd.f32 %v2387, %v2260
        %v2389 = vadd.f32 %v2388, %v2261
        %v2390 = vadd.f32 %v2389, %v2262
        %v2391 = vadd.f32 %v2390, %v2263
        %v2392 = vadd.f32 %v2391, %v2264
        %v2393 = vadd.f32 %v2392, %v2265
        %v2394 = vadd.f32 %v2393, %v2266
        %v2395 = vadd.f32 %v2394, %v2267
        %v2396 = vadd.f32 %v2395, %v2268
        %v2397 = vadd.f32 %v2396, %v2269
        %v2398 = vadd.f32 %v2397, %v2270
        %v2399 = vadd.f32 %v2398, %v2271
        %v2400 = vadd.f32 %v2399, %v2272
        %v2401 = vadd.f32 %v2400, %v2273
        %v2402 = vadd.f32 %v2401, %v2274
        %v2403 = vadd.f32 %v2402, %v2275
        %v2404 = vadd.f32 %v2403, %v2276
        %v2405 = vadd.f32 %v2404, %v2277
        %v2406 = vadd.f32 %v2405, %v2278
        %v2407 = vadd.f32 %v2406, %v2279
        %v2408 = vadd.f32 %v2407, %v2280
        %v2409 = vadd.f32 %v2408, %v2281
        %v2410 = vadd.f32 %v2409, %v2282
        %v2411 = vadd.f32 %v2410, %v2283
        %v2412 = vadd.f32 %v2411, %v2284
        %v2413 = vadd.f32 %v2412, %v2285
        %v2414 = vadd.f32 %v2413, %v2286
        %v2415 = vadd.f32 %v2287, %v2414
        %2416 = vst [vmem:[#allocation2] sm:$0xff] %v2415
        // Predicated region
        $region53: #{stroke_classifier_forward.1} parent=47 // pred_check
          %p2417 = pneg %p305
        $region54: #{stroke_classifier_forward.1} parent=47 // pred_check_branch
          %2419 = sbr.rel (%p2417) target = $region56
        $region55: #{stroke_classifier_forward.1} parent=47 // pred_region
          %v2420 = vld [vmem:[#allocation2] sm:$0xff]
          %v2421 = vrot.slane %v2420, 4
          %v2422 = vadd.f32 %v2420, %v2421
          %v2423 = vrot.slane %v2422, 2
          %v2424 = vadd.f32 %v2422, %v2423
          %v2425 = vrot.slane %v2424, 1
          %v2426 = vadd.f32 %v2424, %v2425
          %v2427 = vmul.f32 %v2426, 0.0009765625
          %v2428 = vpack.c.bf16 %v2427, %v2427
          %v2429 = vld [vmem:[%s3] sm:$0xff]
          %v2430 = vld [vmem:[%s3 + $0x8] sm:$0xff]
          %v2431 = vld [vmem:[%s3 + $0x10] sm:$0xff]
          %v2432 = vld [vmem:[%s3 + $0x18] sm:$0xff]
          %v2433 = vld [vmem:[%s3 + $0x20] sm:$0xff]
          %v2434 = vld [vmem:[%s3 + $0x28] sm:$0xff]
          %v2435 = vld [vmem:[%s3 + $0x30] sm:$0xff]
          %v2436 = vld [vmem:[%s3 + $0x38] sm:$0xff]
          %v2437 = vld [vmem:[%s3 + $0x40] sm:$0xff]
          %v2438 = vld [vmem:[%s3 + $0x48] sm:$0xff]
          %v2439 = vld [vmem:[%s3 + $0x50] sm:$0xff]
          %v2440 = vld [vmem:[%s3 + $0x58] sm:$0xff]
          %v2441 = vld [vmem:[%s3 + $0x60] sm:$0xff]
          %v2442 = vld [vmem:[%s3 + $0x68] sm:$0xff]
          %v2443 = vld [vmem:[%s3 + $0x70] sm:$0xff]
          %v2444 = vld [vmem:[%s3 + $0x78] sm:$0xff]
          %v2445 = vld [vmem:[%s4] sm:$0x3]
          %v2462 = vunpack.c.l.b16 %v2429
          %v2463 = vunpack.c.h.b16 %v2429
          %v2464 = vunpack.c.l.b16 %v2430
          %v2465 = vunpack.c.h.b16 %v2430
          %v2466 = vunpack.c.l.b16 %v2431
          %v2467 = vunpack.c.h.b16 %v2431
          %v2468 = vunpack.c.l.b16 %v2432
          %v2469 = vunpack.c.h.b16 %v2432
          %v2470 = vunpack.c.l.b16 %v2433
          %v2471 = vunpack.c.h.b16 %v2433
          %v2472 = vunpack.c.l.b16 %v2434
          %v2473 = vunpack.c.h.b16 %v2434
          %v2474 = vunpack.c.l.b16 %v2435
          %v2475 = vunpack.c.h.b16 %v2435
          %v2476 = vunpack.c.l.b16 %v2436
          %v2477 = vunpack.c.h.b16 %v2436
          %v2478 = vunpack.c.l.b16 %v2437
          %v2479 = vunpack.c.h.b16 %v2437
          %v2480 = vunpack.c.l.b16 %v2438
          %v2481 = vunpack.c.h.b16 %v2438
          %v2482 = vunpack.c.l.b16 %v2439
          %v2483 = vunpack.c.h.b16 %v2439
          %v2484 = vunpack.c.l.b16 %v2440
          %v2485 = vunpack.c.h.b16 %v2440
          %v2486 = vunpack.c.l.b16 %v2441
          %v2487 = vunpack.c.h.b16 %v2441
          %v2488 = vunpack.c.l.b16 %v2442
          %v2489 = vunpack.c.h.b16 %v2442
          %v2490 = vunpack.c.l.b16 %v2443
          %v2491 = vunpack.c.h.b16 %v2443
          %v2492 = vunpack.c.l.b16 %v2444
          %v2493 = vunpack.c.h.b16 %v2444
          %v2494 = vpack.c.b16 %v2464, %v2462
          %v2495 = vpack.c.b16 %v2465, %v2463
          %v2496 = vpack.c.b16 %v2468, %v2466
          %v2497 = vpack.c.b16 %v2469, %v2467
          %v2498 = vpack.c.b16 %v2472, %v2470
          %v2499 = vpack.c.b16 %v2473, %v2471
          %v2500 = vpack.c.b16 %v2476, %v2474
          %v2501 = vpack.c.b16 %v2477, %v2475
          %v2502 = vpack.c.b16 %v2480, %v2478
          %v2503 = vpack.c.b16 %v2481, %v2479
          %v2504 = vpack.c.b16 %v2484, %v2482
          %v2505 = vpack.c.b16 %v2485, %v2483
          %v2506 = vpack.c.b16 %v2488, %v2486
          %v2507 = vpack.c.b16 %v2489, %v2487
          %v2508 = vpack.c.b16 %v2492, %v2490
          %v2509 = vpack.c.b16 %v2493, %v2491
          %v2527 = vlaneseq
          %v2528 = vshrl.u32 %v2527, 7
          %v2529 = vsub.s32 0, %v2528
          %v2530 = vrot.slane %v2445, %v2529
          %v2531 = vlaneseq
          %v2532 = vshrl.u32 %v2531, 7
          %v2533 = vsub.s32 1, %v2532
          %v2534 = vrot.slane %v2445, %v2533
          %2537 = vmatprep.subr.bf16.mxu0 %v2495
          %2538 = vmatpush1.bf16.msra.mxu0 %v2494
          %2539 = vmatprep.subr.bf16.mxu0 %v2497
          %2540 = vmatpush1.bf16.msra.mxu0 %v2496
          %2541 = vmatprep.subr.bf16.mxu0 %v2499
          %2542 = vmatpush1.bf16.msra.mxu0 %v2498
          %2543 = vmatprep.subr.bf16.mxu0 %v2501
          %2544 = vmatpush1.bf16.msra.mxu0 %v2500
          %2545 = vmatprep.subr.bf16.mxu0 %v2503
          %2546 = vmatpush1.bf16.msra.mxu0 %v2502
          %2547 = vmatprep.subr.bf16.mxu0 %v2505
          %2548 = vmatpush1.bf16.msra.mxu0 %v2504
          %2549 = vmatprep.subr.bf16.mxu0 %v2507
          %2550 = vmatpush1.bf16.msra.mxu0 %v2506
          %2551 = vmatprep.subr.bf16.mxu0 %v2509
          %2552 = vmatpush1.bf16.msra.mxu0 %v2508
          %2553 = vmatprep.subr.bf16.mxu0 0
          %2554 = vmatpush1.bf16.msra.mxu0 0
          %2555 = vmatprep.subr.bf16.mxu0 0
          %2556 = vmatpush1.bf16.msra.mxu0 0
          %2557 = vmatprep.subr.bf16.mxu0 0
          %2558 = vmatpush1.bf16.msra.mxu0 0
          %2559 = vmatprep.subr.bf16.mxu0 0
          %2560 = vmatpush1.bf16.msra.mxu0 0
          %2561 = vmatprep.subr.bf16.mxu0 0
          %2562 = vmatpush1.bf16.msra.mxu0 0
          %2563 = vmatprep.subr.bf16.mxu0 0
          %2564 = vmatpush1.bf16.msra.mxu0 0
          %2565 = vmatprep.subr.bf16.mxu0 0
          %2566 = vmatpush1.bf16.msra.mxu0 0
          %2567 = vmatprep.subr.bf16.mxu0 0
          %2568 = vmatpush1.bf16.msra.mxu0 0
          %2569 = vmatprep.mubr.bf16.mxu0 0
          %2570 = vmatmul.mubr.bf16.gmra.mrb[0].mxu0 %v2428
          %v2571 = vpop.f32.mrb[0].mxu0
          %v2572 = vadd.f32 %v2530, %v2571
          %v2573 = vpop.f32.mrb[0].mxu0
          %v2574 = vadd.f32 %v2534, %v2573
          %v2575 = vpop.f32.mrb[0].mxu0
          %v2576 = vpop.f32.mrb[0].mxu0
          %2577 = vdwg.mxu0
          %v2578 = vmax.f32 %v2572, 0.0
          %v2579 = vmax.f32 %v2574, 0.0
          %v2580 = vpack.c.bf16 %v2578, %v2578
          %v2581 = vpack.c.bf16 %v2579, %v2579
          %v2582 = vld [vmem:[%s5] sm:$0xf]
          %v2583 = vld [vmem:[%s5 + $0x4] sm:$0xf]
          %v2584 = vld [vmem:[%s5 + $0x8] sm:$0xf]
          %v2585 = vld [vmem:[%s5 + $0xc] sm:$0xf]
          %v2586 = vld [vmem:[%s5 + $0x10] sm:$0xf]
          %v2587 = vld [vmem:[%s5 + $0x14] sm:$0xf]
          %v2588 = vld [vmem:[%s5 + $0x18] sm:$0xf]
          %v2589 = vld [vmem:[%s5 + $0x1c] sm:$0xf]
          %v2590 = vld [vmem:[%s5 + $0x20] sm:$0xf]
          %v2591 = vld [vmem:[%s5 + $0x24] sm:$0xf]
          %v2592 = vld [vmem:[%s5 + $0x28] sm:$0xf]
          %v2593 = vld [vmem:[%s5 + $0x2c] sm:$0xf]
          %v2594 = vld [vmem:[%s5 + $0x30] sm:$0xf]
          %v2595 = vld [vmem:[%s5 + $0x34] sm:$0xf]
          %v2596 = vld [vmem:[%s5 + $0x38] sm:$0xf]
          %v2597 = vld [vmem:[%s5 + $0x3c] sm:$0xf]
          %v2598 = vld [vmem:[%s5 + $0x40] sm:$0xf]
          %v2599 = vld [vmem:[%s5 + $0x44] sm:$0xf]
          %v2600 = vld [vmem:[%s5 + $0x48] sm:$0xf]
          %v2601 = vld [vmem:[%s5 + $0x4c] sm:$0xf]
          %v2602 = vld [vmem:[%s5 + $0x50] sm:$0xf]
          %v2603 = vld [vmem:[%s5 + $0x54] sm:$0xf]
          %v2604 = vld [vmem:[%s5 + $0x58] sm:$0xf]
          %v2605 = vld [vmem:[%s5 + $0x5c] sm:$0xf]
          %v2606 = vld [vmem:[%s5 + $0x60] sm:$0xf]
          %v2607 = vld [vmem:[%s5 + $0x64] sm:$0xf]
          %v2608 = vld [vmem:[%s5 + $0x68] sm:$0xf]
          %v2609 = vld [vmem:[%s5 + $0x6c] sm:$0xf]
          %v2610 = vld [vmem:[%s5 + $0x70] sm:$0xf]
          %v2611 = vld [vmem:[%s5 + $0x74] sm:$0xf]
          %v2612 = vld [vmem:[%s5 + $0x78] sm:$0xf]
          %v2613 = vld [vmem:[%s5 + $0x7c] sm:$0xf]
          %v2614 = vld [vmem:[%s6] sm:$0x1]
          %v2647 = vunpack.c.l.b16 %v2582
          %v2648 = vunpack.c.l.b16 %v2583
          %v2649 = vunpack.c.l.b16 %v2584
          %v2650 = vunpack.c.l.b16 %v2585
          %v2651 = vunpack.c.l.b16 %v2586
          %v2652 = vunpack.c.l.b16 %v2587
          %v2653 = vunpack.c.l.b16 %v2588
          %v2654 = vunpack.c.l.b16 %v2589
          %v2655 = vunpack.c.l.b16 %v2590
          %v2656 = vunpack.c.l.b16 %v2591
          %v2657 = vunpack.c.l.b16 %v2592
          %v2658 = vunpack.c.l.b16 %v2593
          %v2659 = vunpack.c.l.b16 %v2594
          %v2660 = vunpack.c.l.b16 %v2595
          %v2661 = vunpack.c.l.b16 %v2596
          %v2662 = vunpack.c.l.b16 %v2597
          %v2663 = vunpack.c.l.b16 %v2598
          %v2664 = vunpack.c.l.b16 %v2599
          %v2665 = vunpack.c.l.b16 %v2600
          %v2666 = vunpack.c.l.b16 %v2601
          %v2667 = vunpack.c.l.b16 %v2602
          %v2668 = vunpack.c.l.b16 %v2603
          %v2669 = vunpack.c.l.b16 %v2604
          %v2670 = vunpack.c.l.b16 %v2605
          %v2671 = vunpack.c.l.b16 %v2606
          %v2672 = vunpack.c.l.b16 %v2607
          %v2673 = vunpack.c.l.b16 %v2608
          %v2674 = vunpack.c.l.b16 %v2609
          %v2675 = vunpack.c.l.b16 %v2610
          %v2676 = vunpack.c.l.b16 %v2611
          %v2677 = vunpack.c.l.b16 %v2612
          %v2678 = vunpack.c.l.b16 %v2613
          %v2679 = vpack.c.b16 %v2648, %v2647
          %v2680 = vpack.c.b16 %v2650, %v2649
          %v2681 = vpack.c.b16 %v2652, %v2651
          %v2682 = vpack.c.b16 %v2654, %v2653
          %v2683 = vpack.c.b16 %v2656, %v2655
          %v2684 = vpack.c.b16 %v2658, %v2657
          %v2685 = vpack.c.b16 %v2660, %v2659
          %v2686 = vpack.c.b16 %v2662, %v2661
          %v2687 = vpack.c.b16 %v2664, %v2663
          %v2688 = vpack.c.b16 %v2666, %v2665
          %v2689 = vpack.c.b16 %v2668, %v2667
          %v2690 = vpack.c.b16 %v2670, %v2669
          %v2691 = vpack.c.b16 %v2672, %v2671
          %v2692 = vpack.c.b16 %v2674, %v2673
          %v2693 = vpack.c.b16 %v2676, %v2675
          %v2694 = vpack.c.b16 %v2678, %v2677
          %2711 = vmatprep.subr.bf16.mxu0 0
          %2712 = vmatpush1.bf16.msra.mxu0 %v2679
          %2713 = vmatprep.subr.bf16.mxu0 0
          %2714 = vmatpush1.bf16.msra.mxu0 %v2680
          %2715 = vmatprep.subr.bf16.mxu0 0
          %2716 = vmatpush1.bf16.msra.mxu0 %v2681
          %2717 = vmatprep.subr.bf16.mxu0 0
          %2718 = vmatpush1.bf16.msra.mxu0 %v2682
          %2719 = vmatprep.subr.bf16.mxu0 0
          %2720 = vmatpush1.bf16.msra.mxu0 %v2683
          %2721 = vmatprep.subr.bf16.mxu0 0
          %2722 = vmatpush1.bf16.msra.mxu0 %v2684
          %2723 = vmatprep.subr.bf16.mxu0 0
          %2724 = vmatpush1.bf16.msra.mxu0 %v2685
          %2725 = vmatprep.subr.bf16.mxu0 0
          %2726 = vmatpush1.bf16.msra.mxu0 %v2686
          %2727 = vmatprep.subr.bf16.mxu0 0
          %2728 = vmatpush1.bf16.msra.mxu0 %v2687
          %2729 = vmatprep.subr.bf16.mxu0 0
          %2730 = vmatpush1.bf16.msra.mxu0 %v2688
          %2731 = vmatprep.subr.bf16.mxu0 0
          %2732 = vmatpush1.bf16.msra.mxu0 %v2689
          %2733 = vmatprep.subr.bf16.mxu0 0
          %2734 = vmatpush1.bf16.msra.mxu0 %v2690
          %2735 = vmatprep.subr.bf16.mxu0 0
          %2736 = vmatpush1.bf16.msra.mxu0 %v2691
          %2737 = vmatprep.subr.bf16.mxu0 0
          %2738 = vmatpush1.bf16.msra.mxu0 %v2692
          %2739 = vmatprep.subr.bf16.mxu0 0
          %2740 = vmatpush1.bf16.msra.mxu0 %v2693
          %2741 = vmatprep.subr.bf16.mxu0 0
          %2742 = vmatpush1.bf16.msra.mxu0 %v2694
          %2743 = vmatprep.mubr.bf16.mxu0 %v2581
          %2744 = vmatmul.mubr.bf16.gmra.mrb[0].mxu0 %v2580
          %v2745 = vpop.f32.mrb[0].mxu0
          %v2746 = vadd.f32 %v2614, %v2745
          %v2747 = vpop.f32.mrb[0].mxu0
          %v2748 = vpop.f32.mrb[0].mxu0
          %v2749 = vpop.f32.mrb[0].mxu0
          %2750 = vdwg.mxu0
          %2751 = vst [vmem:[%s293] sm:$0x1] %v2746
        $region56: #{stroke_classifier_forward.1} parent=47 // pred_fallthru
          _
        %s2752 = sand.u32 %s195, 1
        %s2753 = scalar_lea.sflag [#allocation4], %s2752
        %s2754 = sand.u32 %s195, 1
        %s2755 = scalar_lea.vmem [#allocation3], %s2754
        // Predicated region
        $region57: #{stroke_classifier_forward.1} parent=47 // pred_check
          %p2756 = pneg %p205
        $region58: #{stroke_classifier_forward.1} parent=47 // pred_check_branch
          %2758 = sbr.rel (%p2756) target = $region60
        $region59: #{stroke_classifier_forward.1} parent=47 // pred_region
          %s2760 = ssub.s32 16, 16
          %2761 = vsyncadd %s2753, %s2760
          %s2762 = smul.addr %s25, 16
          %s2763 = scalar_lea.hbm %s7, %s2762
          %s2765 = sshll.u32 %s2755, 4
          %s2766 = int_to_ptr.vmem [resolvable:$true] %s2765
          %2768 = dma.vmem_to_hbm [thread:$0]  %s2766, 16, %s2763, %s2753
        $region60: #{stroke_classifier_forward.1} parent=47 // pred_fallthru
          _
      $region48: #{stroke_classifier_forward.1} parent=5 // pred_fallthru
        _
      %p2769 = scmp.le.s32.totalorder 2, %s16
      // Predicated region
      $region61: #{stroke_classifier_forward.1} parent=5 // pred_check
        %p2770 = pneg %p2769
      $region62: #{stroke_classifier_forward.1} parent=5 // pred_check_branch
        %2772 = sbr.rel (%p2770) target = $region64
      $region63: #{stroke_classifier_forward.1} parent=5 // pred_region
        %s2773 = ssub.s32 %s16, 2
        // Predicated region
        $region65: #{stroke_classifier_forward.1} parent=63 // pred_check
          %p2774 = pneg %p211
        $region66: #{stroke_classifier_forward.1} parent=63 // pred_check_branch
          %2776 = sbr.rel (%p2774) target = $region68
        $region67: #{stroke_classifier_forward.1} parent=63 // pred_region
          %s2777 = sand.u32 %s196, 1
          %s2778 = scalar_lea.sflag [#allocation4], %s2777
          %s2779 = sand.u32 %s196, 1
          %s2780 = scalar_lea.vmem [#allocation3], %s2779
          %2781 = dma.done %s2778, 16
        $region68: #{stroke_classifier_forward.1} parent=63 // pred_fallthru
          _
      $region64: #{stroke_classifier_forward.1} parent=5 // pred_fallthru
        _
    $region6: #{stroke_classifier_forward.1} parent=1 // loop_footer
      %s20 = sadd.s32 1, %s16
    $region7: #{stroke_classifier_forward.1} parent=1 // loop_footer_branch
      %15 = sbr.rel target = $region3
    $region8: #{stroke_classifier_forward.1} parent=1 // loop_exit
      _
    %2782 = vsyncpa [#allocation4], 1
    %s2783 = scalar_lea.sflag [#allocation4], 1
    %2784 = vsyncpa %s2783, 1

</llo_original>
